<compile_context>
chip_gen: v6e
topology: v6e:2x2x1
jax: 0.10.0
libtpu: 0.0.40
codegen_flags: <defaults>
</compile_context>

<pallas_src>
import functools

import numpy as np
import jax
import jax.numpy as jnp
from jax import lax
from jax.experimental import pallas as pl
from jax.experimental.pallas import tpu as pltpu

F32 = jnp.float32
BF16 = jnp.bfloat16
LANE = 128
LEFT_HALO = 8                       # sublane-aligned left halo inside the scratch
INTERMEDIATE_DTYPE = jnp.float32    # conv1 scratch dtype (bf16 worthwhile on v6e/v7x)


def _round_up(v, m):
    return ((v + m - 1) // m) * m


def _pick_strip_rows(h):
    # 4 output rows per strip keeps win/rolled/acc well inside the 64-vreg file.
    for d in (4, 2, 1):
        if h % d == 0:
            return d
    return 1


def _vmem_limit_bytes(needed_bytes):
    """VMEM budget derived from the real footprint and the device capacity."""
    try:
        cap = int(pltpu.get_tpu_info().vmem_capacity_bytes)   # 64 MiB v7x, 128 MiB v5e/v6e
    except Exception:                                         # pragma: no cover
        cap = 64 * 1024 * 1024
    want = max(int(needed_bytes) + (2 << 20), 16 << 20)
    return int(min(want, (cap * 3) // 4))


# --------------------------------------------------------------------------- #
# Fused kernel.  Grid = (batch, row strips).
#   strip 0 of every image:  1x1 conv (MXU, bf16 operands, f32 acc) + BN1 for the
#                            whole image -> persistent VMEM scratch (interior only)
#                            + zero the halo ring the taps read.
#   every strip:             depthwise kxk (aligned window load + pltpu.roll taps)
#                            + BN2 + ReLU -> bf16 output strip.
# --------------------------------------------------------------------------- #
def _light_conv_bn_act_kernel(x_ref, w1_ref, s1_ref, b1_ref,
                              w2_ref, s2_ref, b2_ref,
                              o_ref, y_ref, *, k, pad, H, W, Wp, SH):
    Cp = w1_ref.shape[1]
    LP = LEFT_HALO
    s = pl.program_id(1)
    n_chunks = H // SH

    # ---- conv1 (1x1 + folded BN1) for the whole image, done once per image ----
    @pl.when(s == 0)
    def _conv1_and_halo():
        zdt = y_ref.dtype
        if pad > 0:
            # Zero only the halo ring the depthwise taps actually read.
            # All stores are sublane aligned; this runs once per image per core
            # (NOT guarded on program_id(0)==0, so it is megacore-safe).
            y_ref[0:pad, :, :] = jnp.zeros((pad, Wp, Cp), zdt)
            y_ref[pad + H:pad + H + pad, :, :] = jnp.zeros((pad, Wp, Cp), zdt)
            y_ref[pad:pad + H, 0:LP, :] = jnp.zeros((H, LP, Cp), zdt)
            if Wp - LP - W > 0:
                y_ref[pad:pad + H, LP + W:Wp, :] = jnp.zeros(
                    (H, Wp - LP - W, Cp), zdt)

        w1 = w1_ref[...]                                   # (Cin, Cp) bf16
        s1 = s1_ref[...]
        b1 = b1_ref[...]

        def chunk(c, carry):
            # Matmul only over interior rows; store into the scratch interior
            # (column offset LP=8 keeps the store sublane aligned).
            start = pl.multiple_of(c * (SH * W), SH * W)
            xs = x_ref[pl.ds(start, SH * W), :]            # (SH*W, Cin) bf16
            y = jnp.dot(xs, w1, preferred_element_type=jnp.float32)
            y = y * s1 + b1                                # folded BN1, no act
            y_ref[pl.ds(pad + c * SH, SH), LP:LP + W, :] = (
                y.reshape(SH, W, Cp).astype(zdt))
            return carry

        lax.fori_loop(0, n_chunks, chunk, 0, unroll=True)

    # ---- depthwise kxk + BN2 + ReLU for this row strip -------------------------
    r0 = s * SH                                            # first tap row (scratch coords)
    w2 = w2_ref[...]                                       # (k*k, Cp) f32
    acc = jnp.zeros((SH, W, Cp), jnp.float32)
    for ki in range(k):                                    # static unroll, k is small
        # One aligned, full-width window load per tap row; ki is a pure
        # leading-axis index (no sublane misalignment).
        win = y_ref[pl.ds(r0 + ki, SH), :, :]              # (SH, Wp, Cp)
        for kj in range(k):
            shift = (pad - kj) % Wp                        # static, non-negative
            rolled = win if shift == 0 else pltpu.roll(win, shift, axis=1)
            acc = acc + (rolled[:, LP:LP + W, :].astype(jnp.float32)
                         * w2[ki * k + kj])
    out = jnp.maximum(acc * s2_ref[...] + b2_ref[...], 0.0)   # BN2 + ReLU, f32
    o_ref[...] = out.astype(o_ref.dtype)


def light_conv_bn_act_nhwc(x_nhwc, params, k, *, strip_rows=None):
    """Fused LightConvBNAct forward.  NHWC f32 in -> channel-padded NHWC bf16 out."""
    N, H, W, Cin = x_nhwc.shape
    Cout = params["w1"].shape[1]
    pad = (k - 1) // 2
    assert pad <= LEFT_HALO, "kernel size too large for the fixed left halo"

    SH = strip_rows or _pick_strip_rows(H)
    assert H % SH == 0
    n_strips = H // SH

    Cout_p = _round_up(Cout, LANE)                 # lane-dense output / intermediate
    Wp = _round_up(LEFT_HALO + W + pad, 8)         # sublane-aligned scratch width

    # 1x1 conv needs no spatial halo and Cin stays at its native extent: the
    # activation HBM stream carries no padding bytes.
    xf = x_nhwc.reshape(N, H * W, Cin).astype(BF16)

    w1 = jnp.pad(params["w1"], ((0, 0), (0, Cout_p - Cout))).astype(BF16)
    w2 = jnp.pad(params["w2"], ((0, 0), (0, Cout_p - Cout))).astype(F32)
    s1 = jnp.pad(params["s1"], (0, Cout_p - Cout)).reshape(1, Cout_p).astype(F32)
    b1 = jnp.pad(params["b1"], (0, Cout_p - Cout)).reshape(1, Cout_p).astype(F32)
    s2 = jnp.pad(params["s2"], (0, Cout_p - Cout)).reshape(1, Cout_p).astype(F32)
    b2 = jnp.pad(params["b2"], (0, Cout_p - Cout)).reshape(1, Cout_p).astype(F32)

    kernel = functools.partial(_light_conv_bn_act_kernel,
                               k=k, pad=pad, H=H, W=W, Wp=Wp, SH=SH)

    it = jnp.dtype(INTERMEDIATE_DTYPE).itemsize
    scratch_bytes = (H + 2 * pad) * Wp * Cout_p * it
    need = (2 * H * W * Cin * 2                      # double-buffered input block
            + 2 * SH * W * Cout_p * 2                # double-buffered output strip
            + scratch_bytes
            + 2 * (Cin * Cout_p * 2 + (k * k + 4) * Cout_p * 4))

    out = pl.pallas_call(
        kernel,
        out_shape=jax.ShapeDtypeStruct((N, H, W, Cout_p), BF16),
        grid_spec=pltpu.PrefetchScalarGridSpec(
            num_scalar_prefetch=0,
            grid=(N, n_strips),
            in_specs=[
                pl.BlockSpec((None, H * W, Cin), lambda n, s: (n, 0, 0)),   # x (resident per image)
                pl.BlockSpec((Cin, Cout_p), lambda n, s: (0, 0)),           # w1 (1x1)
                pl.BlockSpec((1, Cout_p), lambda n, s: (0, 0)),             # BN1 scale
                pl.BlockSpec((1, Cout_p), lambda n, s: (0, 0)),             # BN1 bias
                pl.BlockSpec((k * k, Cout_p), lambda n, s: (0, 0)),         # w2 (dw kxk)
                pl.BlockSpec((1, Cout_p), lambda n, s: (0, 0)),             # BN2 scale
                pl.BlockSpec((1, Cout_p), lambda n, s: (0, 0)),             # BN2 bias
            ],
            out_specs=pl.BlockSpec((None, SH, W, Cout_p),
                                   lambda n, s: (n, s, 0, 0)),
            scratch_shapes=[pltpu.VMEM((H + 2 * pad, Wp, Cout_p),
                                       INTERMEDIATE_DTYPE)],
        ),
        compiler_params=pltpu.CompilerParams(
            dimension_semantics=("parallel", "arbitrary"),
            vmem_limit_bytes=_vmem_limit_bytes(need)),
    )(xf, w1, s1, b1, w2, s2, b2)
    return out                                     # (N, H, W, Cout_p) bf16


def light_conv_bn_act(x_nchw, params, k):
    """PyTorch-layout entry point (NCHW f32 in, NCHW f32 out).

    The channel slice and NHWC<->NCHW transposes here exist only to mirror the
    PyTorch module for the test; an NHWC model should call
    light_conv_bn_act_nhwc and consume the padded NHWC bf16 output directly.
    """
    Cout = params["w1"].shape[1]
    x = jnp.transpose(x_nchw, (0, 2, 3, 1))
    out = light_conv_bn_act_nhwc(x, params, k)[..., :Cout]
    return jnp.transpose(out.astype(F32), (0, 3, 1, 2))


# --------------------------------------------------------------------------- #
# Synthetic deterministic parameters (BatchNorm in eval mode, folded).
# --------------------------------------------------------------------------- #
def init_light_conv_bn_act(key, cin, cout, k):
    ks = jax.random.split(key, 10)

    def bn_fold(k0, k1, k2, k3, c):
        gamma = 1.0 + 0.05 * jax.random.normal(k0, (c,), F32)
        beta = 0.05 * jax.random.normal(k1, (c,), F32)
        mean = 0.05 * jax.random.normal(k2, (c,), F32)
        var = 1.0 + jnp.abs(0.05 * jax.random.normal(k3, (c,), F32))
        scale = gamma / jnp.sqrt(var + 1e-5)
        return scale.astype(F32), (beta - mean * scale).astype(F32)

    w1 = (jax.random.normal(ks[0], (cin, cout), F32) / np.sqrt(cin)).astype(F32)
    w2 = (jax.random.normal(ks[1], (k * k, cout), F32) / float(k)).astype(F32)
    s1, b1 = bn_fold(ks[2], ks[3], ks[4], ks[5], cout)
    s2, b2 = bn_fold(ks[6], ks[7], ks[8], ks[9], cout)
    return {"w1": w1, "s1": s1, "b1": b1, "w2": w2, "s2": s2, "b2": b2}


# Pure-JAX reference, mirroring the kernel's rounding points (bf16 MXU operands,
# INTERMEDIATE_DTYPE scratch, bf16 output).
def ref_light_conv_bn_act(x_nchw, params, k):
    x = jnp.transpose(x_nchw, (0, 2, 3, 1)).astype(F32)
    N, H, W, _ = x.shape
    xb = x.astype(BF16).astype(F32)
    w1 = params["w1"].astype(BF16).astype(F32)
    y = jnp.einsum("nhwc,cd->nhwd", xb, w1, precision=lax.Precision.HIGHEST)
    y = (y * params["s1"] + params["b1"])                     # conv1 + BN1 (no act)
    y = y.astype(INTERMEDIATE_DTYPE).astype(F32)
    pad = (k - 1) // 2
    yp = jnp.pad(y, ((0, 0), (pad, pad), (pad, pad), (0, 0)))  # zero-pad conv1 output
    acc = jnp.zeros_like(y)
    for ki in range(k):
        for kj in range(k):
            acc = acc + yp[:, ki:ki + H, kj:kj + W, :] * params["w2"][ki * k + kj, :]
    out = jnp.maximum(acc * params["s2"] + params["b2"], 0.0)  # conv2 + BN2 + ReLU
    out = out.astype(BF16).astype(F32)
    return jnp.transpose(out, (0, 3, 1, 2))


# --------------------------------------------------------------------------- #
if __name__ == "__main__":
    key = jax.random.PRNGKey(0)
    k_x, k_p = jax.random.split(key)

    N, Cin, H, W = 2, 16, 16, 16          # small NCHW input
    Cout, K = 32, 5                        # HGNetv2 light-block style 5x5 depthwise

    x = jax.random.normal(k_x, (N, Cin, H, W), F32)
    params = init_light_conv_bn_act(k_p, Cin, Cout, K)

    fwd = jax.jit(functools.partial(light_conv_bn_act, params=params, k=K))
    out = fwd(x)
    jax.block_until_ready(out)

    assert out.shape == (N, Cout, H, W), out.shape
    assert bool(jnp.all(jnp.isfinite(out)))

    ref = ref_light_conv_bn_act(x, params, K)
    np.testing.assert_allclose(np.asarray(out), np.asarray(ref),
                               rtol=1e-2, atol=1e-2)

    print("KERNEL_OK")
</pallas_src>

<mosaic_0001>
module attributes {stable_mosaic.version = 11 : i64} {
  func.func @_light_conv_bn_act_kernel(%arg0: i32, %arg1: i32, %arg2: memref<1x256x16xbf16, #tpu.memory_space<vmem>>, %arg3: memref<16x128xbf16, #tpu.memory_space<vmem>>, %arg4: memref<1x128xf32, #tpu.memory_space<vmem>>, %arg5: memref<1x128xf32, #tpu.memory_space<vmem>>, %arg6: memref<25x128xf32, #tpu.memory_space<vmem>>, %arg7: memref<1x128xf32, #tpu.memory_space<vmem>>, %arg8: memref<1x128xf32, #tpu.memory_space<vmem>>, %arg9: memref<1x4x16x128xbf16, #tpu.memory_space<vmem>>, %arg10: memref<20x32x128xf32, #tpu.memory_space<vmem>>) attributes {dimension_semantics = [#tpu.dimension_semantics<parallel>, #tpu.dimension_semantics<arbitrary>], iteration_bounds = array<i64: 2, 4>, scalar_prefetch = 0 : i64, scratch_operands = 1 : i64, tpu.core_type = #tpu.core_type<tc>, window_params = [{transform_indices = @transform_0, window_bounds = array<i64: 1, 256, 16>}, {pipeline_mode = #tpu.pipeline_mode<synchronous>, transform_indices = @transform_1, window_bounds = array<i64: 16, 128>}, {pipeline_mode = #tpu.pipeline_mode<synchronous>, transform_indices = @transform_2, window_bounds = array<i64: 1, 128>}, {pipeline_mode = #tpu.pipeline_mode<synchronous>, transform_indices = @transform_3, window_bounds = array<i64: 1, 128>}, {pipeline_mode = #tpu.pipeline_mode<synchronous>, transform_indices = @transform_4, window_bounds = array<i64: 25, 128>}, {pipeline_mode = #tpu.pipeline_mode<synchronous>, transform_indices = @transform_5, window_bounds = array<i64: 1, 128>}, {pipeline_mode = #tpu.pipeline_mode<synchronous>, transform_indices = @transform_6, window_bounds = array<i64: 1, 128>}, {transform_indices = @transform_7, window_bounds = array<i64: 1, 4, 16, 128>}]} {
    %c0_i32 = arith.constant 0 : i32
    %0 = arith.cmpi eq, %arg1, %c0_i32 : i32
    %1 = arith.extui %0 : i1 to i32
    %c0_i32_0 = arith.constant 0 : i32
    %2 = arith.cmpi ne, %1, %c0_i32_0 : i32
    scf.if %2 {
      %cst_41 = arith.constant 0.000000e+00 : f32
      %230 = vector.broadcast %cst_41 : f32 to vector<2x32x128xf32>
      %c0_42 = arith.constant 0 : index
      %c0_43 = arith.constant 0 : index
      %c0_44 = arith.constant 0 : index
      %231 = vector.load %arg10[%c0_42, %c0_43, %c0_44] : memref<20x32x128xf32, #tpu.memory_space<vmem>>, vector<2x32x128xf32>
      tpu.vector_store %arg10[%c0_42, %c0_43, %c0_44], %230 {strides = array<i32>} : memref<20x32x128xf32, #tpu.memory_space<vmem>>, vector<2x32x128xf32>,
      %cst_45 = arith.constant 0.000000e+00 : f32
      %232 = vector.broadcast %cst_45 : f32 to vector<2x32x128xf32>
      %c18 = arith.constant 18 : index
      %c0_46 = arith.constant 0 : index
      %c0_47 = arith.constant 0 : index
      %233 = vector.load %arg10[%c18, %c0_46, %c0_47] : memref<20x32x128xf32, #tpu.memory_space<vmem>>, vector<2x32x128xf32>
      tpu.vector_store %arg10[%c18, %c0_46, %c0_47], %232 {strides = array<i32>} : memref<20x32x128xf32, #tpu.memory_space<vmem>>, vector<2x32x128xf32>,
      %cst_48 = arith.constant 0.000000e+00 : f32
      %234 = vector.broadcast %cst_48 : f32 to vector<16x8x128xf32>
      %c2 = arith.constant 2 : index
      %c0_49 = arith.constant 0 : index
      %c0_50 = arith.constant 0 : index
      %235 = vector.load %arg10[%c2, %c0_49, %c0_50] : memref<20x32x128xf32, #tpu.memory_space<vmem>>, vector<16x8x128xf32>
      tpu.vector_store %arg10[%c2, %c0_49, %c0_50], %234 {strides = array<i32>} : memref<20x32x128xf32, #tpu.memory_space<vmem>>, vector<16x8x128xf32>,
      %cst_51 = arith.constant 0.000000e+00 : f32
      %236 = vector.broadcast %cst_51 : f32 to vector<16x8x128xf32>
      %c2_52 = arith.constant 2 : index
      %c24 = arith.constant 24 : index
      %c0_53 = arith.constant 0 : index
      %237 = vector.load %arg10[%c2_52, %c24, %c0_53] : memref<20x32x128xf32, #tpu.memory_space<vmem>>, vector<16x8x128xf32>
      tpu.vector_store %arg10[%c2_52, %c24, %c0_53], %236 {strides = array<i32>} : memref<20x32x128xf32, #tpu.memory_space<vmem>>, vector<16x8x128xf32>,
      %c0_54 = arith.constant 0 : index
      %c0_55 = arith.constant 0 : index
      %238 = vector.load %arg3[%c0_54, %c0_55] : memref<16x128xbf16, #tpu.memory_space<vmem>>, vector<16x128xbf16>
      %c0_56 = arith.constant 0 : index
      %c0_57 = arith.constant 0 : index
      %239 = vector.load %arg4[%c0_56, %c0_57] : memref<1x128xf32, #tpu.memory_space<vmem>>, vector<1x128xf32>
      %c0_58 = arith.constant 0 : index
      %c0_59 = arith.constant 0 : index
      %240 = vector.load %arg5[%c0_58, %c0_59] : memref<1x128xf32, #tpu.memory_space<vmem>>, vector<1x128xf32>
      %c0_i32_60 = arith.constant 0 : i32
      %c64_i32 = arith.constant 64 : i32
      %241 = arith.muli %c0_i32_60, %c64_i32 : i32
      %242 = tpu.assume_multiple %241, 64 : i32
      %c0_61 = arith.constant 0 : index
      %243 = arith.index_cast %242 : i32 to index
      %c0_62 = arith.constant 0 : index
      %244 = vector.load %arg2[%c0_61, %243, %c0_62] : memref<1x256x16xbf16, #tpu.memory_space<vmem>>, vector<1x64x16xbf16>
      %245 = vector.shape_cast %244 : vector<1x64x16xbf16> to vector<64x16xbf16>
      %cst_63 = arith.constant dense<0.000000e+00> : vector<64x128xf32>
      %246 = tpu.matmul %245, %238, %cst_63 {dimension_numbers = #tpu.dot_dimension_numbers<[1], [0], [0], [1], [0, 0, 1, 1], [], []>} : vector<64x16xbf16>, vector<16x128xbf16>, vector<64x128xf32> -> vector<64x128xf32>
      %247 = vector.broadcast %239 : vector<1x128xf32> to vector<64x128xf32>
      %248 = arith.mulf %246, %247 : vector<64x128xf32>
      %249 = vector.broadcast %240 : vector<1x128xf32> to vector<64x128xf32>
      %250 = arith.addf %248, %249 : vector<64x128xf32>
      %251 = vector.shape_cast %250 : vector<64x128xf32> to vector<4x16x128xf32>
      %c4_i32_64 = arith.constant 4 : i32
      %252 = arith.muli %c0_i32_60, %c4_i32_64 : i32
      %c2_i32_65 = arith.constant 2 : i32
      %253 = arith.addi %c2_i32_65, %252 : i32
      %254 = arith.index_cast %253 : i32 to index
      %c8 = arith.constant 8 : index
      %c0_66 = arith.constant 0 : index
      %255 = vector.load %arg10[%254, %c8, %c0_66] : memref<20x32x128xf32, #tpu.memory_space<vmem>>, vector<4x16x128xf32>
      tpu.vector_store %arg10[%254, %c8, %c0_66], %251 {strides = array<i32>} : memref<20x32x128xf32, #tpu.memory_space<vmem>>, vector<4x16x128xf32>,
      %c1_i32_67 = arith.constant 1 : i32
      %c64_i32_68 = arith.constant 64 : i32
      %256 = arith.muli %c1_i32_67, %c64_i32_68 : i32
      %257 = tpu.assume_multiple %256, 64 : i32
      %c0_69 = arith.constant 0 : index
      %258 = arith.index_cast %257 : i32 to index
      %c0_70 = arith.constant 0 : index
      %259 = vector.load %arg2[%c0_69, %258, %c0_70] : memref<1x256x16xbf16, #tpu.memory_space<vmem>>, vector<1x64x16xbf16>
      %260 = vector.shape_cast %259 : vector<1x64x16xbf16> to vector<64x16xbf16>
      %cst_71 = arith.constant dense<0.000000e+00> : vector<64x128xf32>
      %261 = tpu.matmul %260, %238, %cst_71 {dimension_numbers = #tpu.dot_dimension_numbers<[1], [0], [0], [1], [0, 0, 1, 1], [], []>} : vector<64x16xbf16>, vector<16x128xbf16>, vector<64x128xf32> -> vector<64x128xf32>
      %262 = vector.broadcast %239 : vector<1x128xf32> to vector<64x128xf32>
      %263 = arith.mulf %261, %262 : vector<64x128xf32>
      %264 = vector.broadcast %240 : vector<1x128xf32> to vector<64x128xf32>
      %265 = arith.addf %263, %264 : vector<64x128xf32>
      %266 = vector.shape_cast %265 : vector<64x128xf32> to vector<4x16x128xf32>
      %c4_i32_72 = arith.constant 4 : i32
      %267 = arith.muli %c1_i32_67, %c4_i32_72 : i32
      %c2_i32_73 = arith.constant 2 : i32
      %268 = arith.addi %c2_i32_73, %267 : i32
      %269 = arith.index_cast %268 : i32 to index
      %c8_74 = arith.constant 8 : index
      %c0_75 = arith.constant 0 : index
      %270 = vector.load %arg10[%269, %c8_74, %c0_75] : memref<20x32x128xf32, #tpu.memory_space<vmem>>, vector<4x16x128xf32>
      tpu.vector_store %arg10[%269, %c8_74, %c0_75], %266 {strides = array<i32>} : memref<20x32x128xf32, #tpu.memory_space<vmem>>, vector<4x16x128xf32>,
      %c2_i32_76 = arith.constant 2 : i32
      %c64_i32_77 = arith.constant 64 : i32
      %271 = arith.muli %c2_i32_76, %c64_i32_77 : i32
      %272 = tpu.assume_multiple %271, 64 : i32
      %c0_78 = arith.constant 0 : index
      %273 = arith.index_cast %272 : i32 to index
      %c0_79 = arith.constant 0 : index
      %274 = vector.load %arg2[%c0_78, %273, %c0_79] : memref<1x256x16xbf16, #tpu.memory_space<vmem>>, vector<1x64x16xbf16>
      %275 = vector.shape_cast %274 : vector<1x64x16xbf16> to vector<64x16xbf16>
      %cst_80 = arith.constant dense<0.000000e+00> : vector<64x128xf32>
      %276 = tpu.matmul %275, %238, %cst_80 {dimension_numbers = #tpu.dot_dimension_numbers<[1], [0], [0], [1], [0, 0, 1, 1], [], []>} : vector<64x16xbf16>, vector<16x128xbf16>, vector<64x128xf32> -> vector<64x128xf32>
      %277 = vector.broadcast %239 : vector<1x128xf32> to vector<64x128xf32>
      %278 = arith.mulf %276, %277 : vector<64x128xf32>
      %279 = vector.broadcast %240 : vector<1x128xf32> to vector<64x128xf32>
      %280 = arith.addf %278, %279 : vector<64x128xf32>
      %281 = vector.shape_cast %280 : vector<64x128xf32> to vector<4x16x128xf32>
      %c4_i32_81 = arith.constant 4 : i32
      %282 = arith.muli %c2_i32_76, %c4_i32_81 : i32
      %c2_i32_82 = arith.constant 2 : i32
      %283 = arith.addi %c2_i32_82, %282 : i32
      %284 = arith.index_cast %283 : i32 to index
      %c8_83 = arith.constant 8 : index
      %c0_84 = arith.constant 0 : index
      %285 = vector.load %arg10[%284, %c8_83, %c0_84] : memref<20x32x128xf32, #tpu.memory_space<vmem>>, vector<4x16x128xf32>
      tpu.vector_store %arg10[%284, %c8_83, %c0_84], %281 {strides = array<i32>} : memref<20x32x128xf32, #tpu.memory_space<vmem>>, vector<4x16x128xf32>,
      %c3_i32_85 = arith.constant 3 : i32
      %c64_i32_86 = arith.constant 64 : i32
      %286 = arith.muli %c3_i32_85, %c64_i32_86 : i32
      %287 = tpu.assume_multiple %286, 64 : i32
      %c0_87 = arith.constant 0 : index
      %288 = arith.index_cast %287 : i32 to index
      %c0_88 = arith.constant 0 : index
      %289 = vector.load %arg2[%c0_87, %288, %c0_88] : memref<1x256x16xbf16, #tpu.memory_space<vmem>>, vector<1x64x16xbf16>
      %290 = vector.shape_cast %289 : vector<1x64x16xbf16> to vector<64x16xbf16>
      %cst_89 = arith.constant dense<0.000000e+00> : vector<64x128xf32>
      %291 = tpu.matmul %290, %238, %cst_89 {dimension_numbers = #tpu.dot_dimension_numbers<[1], [0], [0], [1], [0, 0, 1, 1], [], []>} : vector<64x16xbf16>, vector<16x128xbf16>, vector<64x128xf32> -> vector<64x128xf32>
      %292 = vector.broadcast %239 : vector<1x128xf32> to vector<64x128xf32>
      %293 = arith.mulf %291, %292 : vector<64x128xf32>
      %294 = vector.broadcast %240 : vector<1x128xf32> to vector<64x128xf32>
      %295 = arith.addf %293, %294 : vector<64x128xf32>
      %296 = vector.shape_cast %295 : vector<64x128xf32> to vector<4x16x128xf32>
      %c4_i32_90 = arith.constant 4 : i32
      %297 = arith.muli %c3_i32_85, %c4_i32_90 : i32
      %c2_i32_91 = arith.constant 2 : i32
      %298 = arith.addi %c2_i32_91, %297 : i32
      %299 = arith.index_cast %298 : i32 to index
      %c8_92 = arith.constant 8 : index
      %c0_93 = arith.constant 0 : index
      %300 = vector.load %arg10[%299, %c8_92, %c0_93] : memref<20x32x128xf32, #tpu.memory_space<vmem>>, vector<4x16x128xf32>
      tpu.vector_store %arg10[%299, %c8_92, %c0_93], %296 {strides = array<i32>} : memref<20x32x128xf32, #tpu.memory_space<vmem>>, vector<4x16x128xf32>,
      %c4_i32_94 = arith.constant 4 : i32
    } else {
    }
    %c4_i32 = arith.constant 4 : i32
    %3 = arith.muli %arg1, %c4_i32 : i32
    %c0 = arith.constant 0 : index
    %c0_1 = arith.constant 0 : index
    %4 = vector.load %arg6[%c0, %c0_1] : memref<25x128xf32, #tpu.memory_space<vmem>>, vector<25x128xf32>
    %cst = arith.constant 0.000000e+00 : f32
    %5 = vector.broadcast %cst : f32 to vector<4x16x128xf32>
    %c0_i32_2 = arith.constant 0 : i32
    %6 = arith.addi %3, %c0_i32_2 : i32
    %7 = arith.index_cast %6 : i32 to index
    %c0_3 = arith.constant 0 : index
    %c0_4 = arith.constant 0 : index
    %8 = vector.load %arg10[%7, %c0_3, %c0_4] : memref<20x32x128xf32, #tpu.memory_space<vmem>>, vector<4x32x128xf32>
    %c2_i32 = arith.constant 2 : i32
    %9 = tpu.dynamic_rotate %8 by %c2_i32 dim 1 : vector<4x32x128xf32>, i32 -> vector<4x32x128xf32>
    %10 = vector.extract_strided_slice %9 {offsets = [0, 8, 0], sizes = [4, 16, 128], strides = [1, 1, 1]} : vector<4x32x128xf32> to vector<4x16x128xf32>
    %11 = vector.extract_strided_slice %4 {offsets = [0, 0], sizes = [1, 128], strides = [1, 1]} : vector<25x128xf32> to vector<1x128xf32>
    %12 = vector.shape_cast %11 : vector<1x128xf32> to vector<128xf32>
    %13 = vector.shape_cast %12 : vector<128xf32> to vector<1x1x128xf32>
    %14 = vector.broadcast %13 : vector<1x1x128xf32> to vector<4x16x128xf32>
    %15 = arith.mulf %10, %14 : vector<4x16x128xf32>
    %16 = arith.addf %5, %15 : vector<4x16x128xf32>
    %c1_i32 = arith.constant 1 : i32
    %17 = tpu.dynamic_rotate %8 by %c1_i32 dim 1 : vector<4x32x128xf32>, i32 -> vector<4x32x128xf32>
    %18 = vector.extract_strided_slice %17 {offsets = [0, 8, 0], sizes = [4, 16, 128], strides = [1, 1, 1]} : vector<4x32x128xf32> to vector<4x16x128xf32>
    %19 = vector.extract_strided_slice %4 {offsets = [1, 0], sizes = [1, 128], strides = [1, 1]} : vector<25x128xf32> to vector<1x128xf32>
    %20 = vector.shape_cast %19 : vector<1x128xf32> to vector<128xf32>
    %21 = vector.shape_cast %20 : vector<128xf32> to vector<1x1x128xf32>
    %22 = vector.broadcast %21 : vector<1x1x128xf32> to vector<4x16x128xf32>
    %23 = arith.mulf %18, %22 : vector<4x16x128xf32>
    %24 = arith.addf %16, %23 : vector<4x16x128xf32>
    %25 = vector.extract_strided_slice %8 {offsets = [0, 8, 0], sizes = [4, 16, 128], strides = [1, 1, 1]} : vector<4x32x128xf32> to vector<4x16x128xf32>
    %26 = vector.extract_strided_slice %4 {offsets = [2, 0], sizes = [1, 128], strides = [1, 1]} : vector<25x128xf32> to vector<1x128xf32>
    %27 = vector.shape_cast %26 : vector<1x128xf32> to vector<128xf32>
    %28 = vector.shape_cast %27 : vector<128xf32> to vector<1x1x128xf32>
    %29 = vector.broadcast %28 : vector<1x1x128xf32> to vector<4x16x128xf32>
    %30 = arith.mulf %25, %29 : vector<4x16x128xf32>
    %31 = arith.addf %24, %30 : vector<4x16x128xf32>
    %c31_i32 = arith.constant 31 : i32
    %32 = tpu.dynamic_rotate %8 by %c31_i32 dim 1 : vector<4x32x128xf32>, i32 -> vector<4x32x128xf32>
    %33 = vector.extract_strided_slice %32 {offsets = [0, 8, 0], sizes = [4, 16, 128], strides = [1, 1, 1]} : vector<4x32x128xf32> to vector<4x16x128xf32>
    %34 = vector.extract_strided_slice %4 {offsets = [3, 0], sizes = [1, 128], strides = [1, 1]} : vector<25x128xf32> to vector<1x128xf32>
    %35 = vector.shape_cast %34 : vector<1x128xf32> to vector<128xf32>
    %36 = vector.shape_cast %35 : vector<128xf32> to vector<1x1x128xf32>
    %37 = vector.broadcast %36 : vector<1x1x128xf32> to vector<4x16x128xf32>
    %38 = arith.mulf %33, %37 : vector<4x16x128xf32>
    %39 = arith.addf %31, %38 : vector<4x16x128xf32>
    %c30_i32 = arith.constant 30 : i32
    %40 = tpu.dynamic_rotate %8 by %c30_i32 dim 1 : vector<4x32x128xf32>, i32 -> vector<4x32x128xf32>
    %41 = vector.extract_strided_slice %40 {offsets = [0, 8, 0], sizes = [4, 16, 128], strides = [1, 1, 1]} : vector<4x32x128xf32> to vector<4x16x128xf32>
    %42 = vector.extract_strided_slice %4 {offsets = [4, 0], sizes = [1, 128], strides = [1, 1]} : vector<25x128xf32> to vector<1x128xf32>
    %43 = vector.shape_cast %42 : vector<1x128xf32> to vector<128xf32>
    %44 = vector.shape_cast %43 : vector<128xf32> to vector<1x1x128xf32>
    %45 = vector.broadcast %44 : vector<1x1x128xf32> to vector<4x16x128xf32>
    %46 = arith.mulf %41, %45 : vector<4x16x128xf32>
    %47 = arith.addf %39, %46 : vector<4x16x128xf32>
    %c1_i32_5 = arith.constant 1 : i32
    %48 = arith.addi %3, %c1_i32_5 : i32
    %49 = arith.index_cast %48 : i32 to index
    %c0_6 = arith.constant 0 : index
    %c0_7 = arith.constant 0 : index
    %50 = vector.load %arg10[%49, %c0_6, %c0_7] : memref<20x32x128xf32, #tpu.memory_space<vmem>>, vector<4x32x128xf32>
    %c2_i32_8 = arith.constant 2 : i32
    %51 = tpu.dynamic_rotate %50 by %c2_i32_8 dim 1 : vector<4x32x128xf32>, i32 -> vector<4x32x128xf32>
    %52 = vector.extract_strided_slice %51 {offsets = [0, 8, 0], sizes = [4, 16, 128], strides = [1, 1, 1]} : vector<4x32x128xf32> to vector<4x16x128xf32>
    %53 = vector.extract_strided_slice %4 {offsets = [5, 0], sizes = [1, 128], strides = [1, 1]} : vector<25x128xf32> to vector<1x128xf32>
    %54 = vector.shape_cast %53 : vector<1x128xf32> to vector<128xf32>
    %55 = vector.shape_cast %54 : vector<128xf32> to vector<1x1x128xf32>
    %56 = vector.broadcast %55 : vector<1x1x128xf32> to vector<4x16x128xf32>
    %57 = arith.mulf %52, %56 : vector<4x16x128xf32>
    %58 = arith.addf %47, %57 : vector<4x16x128xf32>
    %c1_i32_9 = arith.constant 1 : i32
    %59 = tpu.dynamic_rotate %50 by %c1_i32_9 dim 1 : vector<4x32x128xf32>, i32 -> vector<4x32x128xf32>
    %60 = vector.extract_strided_slice %59 {offsets = [0, 8, 0], sizes = [4, 16, 128], strides = [1, 1, 1]} : vector<4x32x128xf32> to vector<4x16x128xf32>
    %61 = vector.extract_strided_slice %4 {offsets = [6, 0], sizes = [1, 128], strides = [1, 1]} : vector<25x128xf32> to vector<1x128xf32>
    %62 = vector.shape_cast %61 : vector<1x128xf32> to vector<128xf32>
    %63 = vector.shape_cast %62 : vector<128xf32> to vector<1x1x128xf32>
    %64 = vector.broadcast %63 : vector<1x1x128xf32> to vector<4x16x128xf32>
    %65 = arith.mulf %60, %64 : vector<4x16x128xf32>
    %66 = arith.addf %58, %65 : vector<4x16x128xf32>
    %67 = vector.extract_strided_slice %50 {offsets = [0, 8, 0], sizes = [4, 16, 128], strides = [1, 1, 1]} : vector<4x32x128xf32> to vector<4x16x128xf32>
    %68 = vector.extract_strided_slice %4 {offsets = [7, 0], sizes = [1, 128], strides = [1, 1]} : vector<25x128xf32> to vector<1x128xf32>
    %69 = vector.shape_cast %68 : vector<1x128xf32> to vector<128xf32>
    %70 = vector.shape_cast %69 : vector<128xf32> to vector<1x1x128xf32>
    %71 = vector.broadcast %70 : vector<1x1x128xf32> to vector<4x16x128xf32>
    %72 = arith.mulf %67, %71 : vector<4x16x128xf32>
    %73 = arith.addf %66, %72 : vector<4x16x128xf32>
    %c31_i32_10 = arith.constant 31 : i32
    %74 = tpu.dynamic_rotate %50 by %c31_i32_10 dim 1 : vector<4x32x128xf32>, i32 -> vector<4x32x128xf32>
    %75 = vector.extract_strided_slice %74 {offsets = [0, 8, 0], sizes = [4, 16, 128], strides = [1, 1, 1]} : vector<4x32x128xf32> to vector<4x16x128xf32>
    %76 = vector.extract_strided_slice %4 {offsets = [8, 0], sizes = [1, 128], strides = [1, 1]} : vector<25x128xf32> to vector<1x128xf32>
    %77 = vector.shape_cast %76 : vector<1x128xf32> to vector<128xf32>
    %78 = vector.shape_cast %77 : vector<128xf32> to vector<1x1x128xf32>
    %79 = vector.broadcast %78 : vector<1x1x128xf32> to vector<4x16x128xf32>
    %80 = arith.mulf %75, %79 : vector<4x16x128xf32>
    %81 = arith.addf %73, %80 : vector<4x16x128xf32>
    %c30_i32_11 = arith.constant 30 : i32
    %82 = tpu.dynamic_rotate %50 by %c30_i32_11 dim 1 : vector<4x32x128xf32>, i32 -> vector<4x32x128xf32>
    %83 = vector.extract_strided_slice %82 {offsets = [0, 8, 0], sizes = [4, 16, 128], strides = [1, 1, 1]} : vector<4x32x128xf32> to vector<4x16x128xf32>
    %84 = vector.extract_strided_slice %4 {offsets = [9, 0], sizes = [1, 128], strides = [1, 1]} : vector<25x128xf32> to vector<1x128xf32>
    %85 = vector.shape_cast %84 : vector<1x128xf32> to vector<128xf32>
    %86 = vector.shape_cast %85 : vector<128xf32> to vector<1x1x128xf32>
    %87 = vector.broadcast %86 : vector<1x1x128xf32> to vector<4x16x128xf32>
    %88 = arith.mulf %83, %87 : vector<4x16x128xf32>
    %89 = arith.addf %81, %88 : vector<4x16x128xf32>
    %c2_i32_12 = arith.constant 2 : i32
    %90 = arith.addi %3, %c2_i32_12 : i32
    %91 = arith.index_cast %90 : i32 to index
    %c0_13 = arith.constant 0 : index
    %c0_14 = arith.constant 0 : index
    %92 = vector.load %arg10[%91, %c0_13, %c0_14] : memref<20x32x128xf32, #tpu.memory_space<vmem>>, vector<4x32x128xf32>
    %c2_i32_15 = arith.constant 2 : i32
    %93 = tpu.dynamic_rotate %92 by %c2_i32_15 dim 1 : vector<4x32x128xf32>, i32 -> vector<4x32x128xf32>
    %94 = vector.extract_strided_slice %93 {offsets = [0, 8, 0], sizes = [4, 16, 128], strides = [1, 1, 1]} : vector<4x32x128xf32> to vector<4x16x128xf32>
    %95 = vector.extract_strided_slice %4 {offsets = [10, 0], sizes = [1, 128], strides = [1, 1]} : vector<25x128xf32> to vector<1x128xf32>
    %96 = vector.shape_cast %95 : vector<1x128xf32> to vector<128xf32>
    %97 = vector.shape_cast %96 : vector<128xf32> to vector<1x1x128xf32>
    %98 = vector.broadcast %97 : vector<1x1x128xf32> to vector<4x16x128xf32>
    %99 = arith.mulf %94, %98 : vector<4x16x128xf32>
    %100 = arith.addf %89, %99 : vector<4x16x128xf32>
    %c1_i32_16 = arith.constant 1 : i32
    %101 = tpu.dynamic_rotate %92 by %c1_i32_16 dim 1 : vector<4x32x128xf32>, i32 -> vector<4x32x128xf32>
    %102 = vector.extract_strided_slice %101 {offsets = [0, 8, 0], sizes = [4, 16, 128], strides = [1, 1, 1]} : vector<4x32x128xf32> to vector<4x16x128xf32>
    %103 = vector.extract_strided_slice %4 {offsets = [11, 0], sizes = [1, 128], strides = [1, 1]} : vector<25x128xf32> to vector<1x128xf32>
    %104 = vector.shape_cast %103 : vector<1x128xf32> to vector<128xf32>
    %105 = vector.shape_cast %104 : vector<128xf32> to vector<1x1x128xf32>
    %106 = vector.broadcast %105 : vector<1x1x128xf32> to vector<4x16x128xf32>
    %107 = arith.mulf %102, %106 : vector<4x16x128xf32>
    %108 = arith.addf %100, %107 : vector<4x16x128xf32>
    %109 = vector.extract_strided_slice %92 {offsets = [0, 8, 0], sizes = [4, 16, 128], strides = [1, 1, 1]} : vector<4x32x128xf32> to vector<4x16x128xf32>
    %110 = vector.extract_strided_slice %4 {offsets = [12, 0], sizes = [1, 128], strides = [1, 1]} : vector<25x128xf32> to vector<1x128xf32>
    %111 = vector.shape_cast %110 : vector<1x128xf32> to vector<128xf32>
    %112 = vector.shape_cast %111 : vector<128xf32> to vector<1x1x128xf32>
    %113 = vector.broadcast %112 : vector<1x1x128xf32> to vector<4x16x128xf32>
    %114 = arith.mulf %109, %113 : vector<4x16x128xf32>
    %115 = arith.addf %108, %114 : vector<4x16x128xf32>
    %c31_i32_17 = arith.constant 31 : i32
    %116 = tpu.dynamic_rotate %92 by %c31_i32_17 dim 1 : vector<4x32x128xf32>, i32 -> vector<4x32x128xf32>
    %117 = vector.extract_strided_slice %116 {offsets = [0, 8, 0], sizes = [4, 16, 128], strides = [1, 1, 1]} : vector<4x32x128xf32> to vector<4x16x128xf32>
    %118 = vector.extract_strided_slice %4 {offsets = [13, 0], sizes = [1, 128], strides = [1, 1]} : vector<25x128xf32> to vector<1x128xf32>
    %119 = vector.shape_cast %118 : vector<1x128xf32> to vector<128xf32>
    %120 = vector.shape_cast %119 : vector<128xf32> to vector<1x1x128xf32>
    %121 = vector.broadcast %120 : vector<1x1x128xf32> to vector<4x16x128xf32>
    %122 = arith.mulf %117, %121 : vector<4x16x128xf32>
    %123 = arith.addf %115, %122 : vector<4x16x128xf32>
    %c30_i32_18 = arith.constant 30 : i32
    %124 = tpu.dynamic_rotate %92 by %c30_i32_18 dim 1 : vector<4x32x128xf32>, i32 -> vector<4x32x128xf32>
    %125 = vector.extract_strided_slice %124 {offsets = [0, 8, 0], sizes = [4, 16, 128], strides = [1, 1, 1]} : vector<4x32x128xf32> to vector<4x16x128xf32>
    %126 = vector.extract_strided_slice %4 {offsets = [14, 0], sizes = [1, 128], strides = [1, 1]} : vector<25x128xf32> to vector<1x128xf32>
    %127 = vector.shape_cast %126 : vector<1x128xf32> to vector<128xf32>
    %128 = vector.shape_cast %127 : vector<128xf32> to vector<1x1x128xf32>
    %129 = vector.broadcast %128 : vector<1x1x128xf32> to vector<4x16x128xf32>
    %130 = arith.mulf %125, %129 : vector<4x16x128xf32>
    %131 = arith.addf %123, %130 : vector<4x16x128xf32>
    %c3_i32 = arith.constant 3 : i32
    %132 = arith.addi %3, %c3_i32 : i32
    %133 = arith.index_cast %132 : i32 to index
    %c0_19 = arith.constant 0 : index
    %c0_20 = arith.constant 0 : index
    %134 = vector.load %arg10[%133, %c0_19, %c0_20] : memref<20x32x128xf32, #tpu.memory_space<vmem>>, vector<4x32x128xf32>
    %c2_i32_21 = arith.constant 2 : i32
    %135 = tpu.dynamic_rotate %134 by %c2_i32_21 dim 1 : vector<4x32x128xf32>, i32 -> vector<4x32x128xf32>
    %136 = vector.extract_strided_slice %135 {offsets = [0, 8, 0], sizes = [4, 16, 128], strides = [1, 1, 1]} : vector<4x32x128xf32> to vector<4x16x128xf32>
    %137 = vector.extract_strided_slice %4 {offsets = [15, 0], sizes = [1, 128], strides = [1, 1]} : vector<25x128xf32> to vector<1x128xf32>
    %138 = vector.shape_cast %137 : vector<1x128xf32> to vector<128xf32>
    %139 = vector.shape_cast %138 : vector<128xf32> to vector<1x1x128xf32>
    %140 = vector.broadcast %139 : vector<1x1x128xf32> to vector<4x16x128xf32>
    %141 = arith.mulf %136, %140 : vector<4x16x128xf32>
    %142 = arith.addf %131, %141 : vector<4x16x128xf32>
    %c1_i32_22 = arith.constant 1 : i32
    %143 = tpu.dynamic_rotate %134 by %c1_i32_22 dim 1 : vector<4x32x128xf32>, i32 -> vector<4x32x128xf32>
    %144 = vector.extract_strided_slice %143 {offsets = [0, 8, 0], sizes = [4, 16, 128], strides = [1, 1, 1]} : vector<4x32x128xf32> to vector<4x16x128xf32>
    %145 = vector.extract_strided_slice %4 {offsets = [16, 0], sizes = [1, 128], strides = [1, 1]} : vector<25x128xf32> to vector<1x128xf32>
    %146 = vector.shape_cast %145 : vector<1x128xf32> to vector<128xf32>
    %147 = vector.shape_cast %146 : vector<128xf32> to vector<1x1x128xf32>
    %148 = vector.broadcast %147 : vector<1x1x128xf32> to vector<4x16x128xf32>
    %149 = arith.mulf %144, %148 : vector<4x16x128xf32>
    %150 = arith.addf %142, %149 : vector<4x16x128xf32>
    %151 = vector.extract_strided_slice %134 {offsets = [0, 8, 0], sizes = [4, 16, 128], strides = [1, 1, 1]} : vector<4x32x128xf32> to vector<4x16x128xf32>
    %152 = vector.extract_strided_slice %4 {offsets = [17, 0], sizes = [1, 128], strides = [1, 1]} : vector<25x128xf32> to vector<1x128xf32>
    %153 = vector.shape_cast %152 : vector<1x128xf32> to vector<128xf32>
    %154 = vector.shape_cast %153 : vector<128xf32> to vector<1x1x128xf32>
    %155 = vector.broadcast %154 : vector<1x1x128xf32> to vector<4x16x128xf32>
    %156 = arith.mulf %151, %155 : vector<4x16x128xf32>
    %157 = arith.addf %150, %156 : vector<4x16x128xf32>
    %c31_i32_23 = arith.constant 31 : i32
    %158 = tpu.dynamic_rotate %134 by %c31_i32_23 dim 1 : vector<4x32x128xf32>, i32 -> vector<4x32x128xf32>
    %159 = vector.extract_strided_slice %158 {offsets = [0, 8, 0], sizes = [4, 16, 128], strides = [1, 1, 1]} : vector<4x32x128xf32> to vector<4x16x128xf32>
    %160 = vector.extract_strided_slice %4 {offsets = [18, 0], sizes = [1, 128], strides = [1, 1]} : vector<25x128xf32> to vector<1x128xf32>
    %161 = vector.shape_cast %160 : vector<1x128xf32> to vector<128xf32>
    %162 = vector.shape_cast %161 : vector<128xf32> to vector<1x1x128xf32>
    %163 = vector.broadcast %162 : vector<1x1x128xf32> to vector<4x16x128xf32>
    %164 = arith.mulf %159, %163 : vector<4x16x128xf32>
    %165 = arith.addf %157, %164 : vector<4x16x128xf32>
    %c30_i32_24 = arith.constant 30 : i32
    %166 = tpu.dynamic_rotate %134 by %c30_i32_24 dim 1 : vector<4x32x128xf32>, i32 -> vector<4x32x128xf32>
    %167 = vector.extract_strided_slice %166 {offsets = [0, 8, 0], sizes = [4, 16, 128], strides = [1, 1, 1]} : vector<4x32x128xf32> to vector<4x16x128xf32>
    %168 = vector.extract_strided_slice %4 {offsets = [19, 0], sizes = [1, 128], strides = [1, 1]} : vector<25x128xf32> to vector<1x128xf32>
    %169 = vector.shape_cast %168 : vector<1x128xf32> to vector<128xf32>
    %170 = vector.shape_cast %169 : vector<128xf32> to vector<1x1x128xf32>
    %171 = vector.broadcast %170 : vector<1x1x128xf32> to vector<4x16x128xf32>
    %172 = arith.mulf %167, %171 : vector<4x16x128xf32>
    %173 = arith.addf %165, %172 : vector<4x16x128xf32>
    %c4_i32_25 = arith.constant 4 : i32
    %174 = arith.addi %3, %c4_i32_25 : i32
    %175 = arith.index_cast %174 : i32 to index
    %c0_26 = arith.constant 0 : index
    %c0_27 = arith.constant 0 : index
    %176 = vector.load %arg10[%175, %c0_26, %c0_27] : memref<20x32x128xf32, #tpu.memory_space<vmem>>, vector<4x32x128xf32>
    %c2_i32_28 = arith.constant 2 : i32
    %177 = tpu.dynamic_rotate %176 by %c2_i32_28 dim 1 : vector<4x32x128xf32>, i32 -> vector<4x32x128xf32>
    %178 = vector.extract_strided_slice %177 {offsets = [0, 8, 0], sizes = [4, 16, 128], strides = [1, 1, 1]} : vector<4x32x128xf32> to vector<4x16x128xf32>
    %179 = vector.extract_strided_slice %4 {offsets = [20, 0], sizes = [1, 128], strides = [1, 1]} : vector<25x128xf32> to vector<1x128xf32>
    %180 = vector.shape_cast %179 : vector<1x128xf32> to vector<128xf32>
    %181 = vector.shape_cast %180 : vector<128xf32> to vector<1x1x128xf32>
    %182 = vector.broadcast %181 : vector<1x1x128xf32> to vector<4x16x128xf32>
    %183 = arith.mulf %178, %182 : vector<4x16x128xf32>
    %184 = arith.addf %173, %183 : vector<4x16x128xf32>
    %c1_i32_29 = arith.constant 1 : i32
    %185 = tpu.dynamic_rotate %176 by %c1_i32_29 dim 1 : vector<4x32x128xf32>, i32 -> vector<4x32x128xf32>
    %186 = vector.extract_strided_slice %185 {offsets = [0, 8, 0], sizes = [4, 16, 128], strides = [1, 1, 1]} : vector<4x32x128xf32> to vector<4x16x128xf32>
    %187 = vector.extract_strided_slice %4 {offsets = [21, 0], sizes = [1, 128], strides = [1, 1]} : vector<25x128xf32> to vector<1x128xf32>
    %188 = vector.shape_cast %187 : vector<1x128xf32> to vector<128xf32>
    %189 = vector.shape_cast %188 : vector<128xf32> to vector<1x1x128xf32>
    %190 = vector.broadcast %189 : vector<1x1x128xf32> to vector<4x16x128xf32>
    %191 = arith.mulf %186, %190 : vector<4x16x128xf32>
    %192 = arith.addf %184, %191 : vector<4x16x128xf32>
    %193 = vector.extract_strided_slice %176 {offsets = [0, 8, 0], sizes = [4, 16, 128], strides = [1, 1, 1]} : vector<4x32x128xf32> to vector<4x16x128xf32>
    %194 = vector.extract_strided_slice %4 {offsets = [22, 0], sizes = [1, 128], strides = [1, 1]} : vector<25x128xf32> to vector<1x128xf32>
    %195 = vector.shape_cast %194 : vector<1x128xf32> to vector<128xf32>
    %196 = vector.shape_cast %195 : vector<128xf32> to vector<1x1x128xf32>
    %197 = vector.broadcast %196 : vector<1x1x128xf32> to vector<4x16x128xf32>
    %198 = arith.mulf %193, %197 : vector<4x16x128xf32>
    %199 = arith.addf %192, %198 : vector<4x16x128xf32>
    %c31_i32_30 = arith.constant 31 : i32
    %200 = tpu.dynamic_rotate %176 by %c31_i32_30 dim 1 : vector<4x32x128xf32>, i32 -> vector<4x32x128xf32>
    %201 = vector.extract_strided_slice %200 {offsets = [0, 8, 0], sizes = [4, 16, 128], strides = [1, 1, 1]} : vector<4x32x128xf32> to vector<4x16x128xf32>
    %202 = vector.extract_strided_slice %4 {offsets = [23, 0], sizes = [1, 128], strides = [1, 1]} : vector<25x128xf32> to vector<1x128xf32>
    %203 = vector.shape_cast %202 : vector<1x128xf32> to vector<128xf32>
    %204 = vector.shape_cast %203 : vector<128xf32> to vector<1x1x128xf32>
    %205 = vector.broadcast %204 : vector<1x1x128xf32> to vector<4x16x128xf32>
    %206 = arith.mulf %201, %205 : vector<4x16x128xf32>
    %207 = arith.addf %199, %206 : vector<4x16x128xf32>
    %c30_i32_31 = arith.constant 30 : i32
    %208 = tpu.dynamic_rotate %176 by %c30_i32_31 dim 1 : vector<4x32x128xf32>, i32 -> vector<4x32x128xf32>
    %209 = vector.extract_strided_slice %208 {offsets = [0, 8, 0], sizes = [4, 16, 128], strides = [1, 1, 1]} : vector<4x32x128xf32> to vector<4x16x128xf32>
    %210 = vector.extract_strided_slice %4 {offsets = [24, 0], sizes = [1, 128], strides = [1, 1]} : vector<25x128xf32> to vector<1x128xf32>
    %211 = vector.shape_cast %210 : vector<1x128xf32> to vector<128xf32>
    %212 = vector.shape_cast %211 : vector<128xf32> to vector<1x1x128xf32>
    %213 = vector.broadcast %212 : vector<1x1x128xf32> to vector<4x16x128xf32>
    %214 = arith.mulf %209, %213 : vector<4x16x128xf32>
    %215 = arith.addf %207, %214 : vector<4x16x128xf32>
    %c0_32 = arith.constant 0 : index
    %c0_33 = arith.constant 0 : index
    %216 = vector.load %arg7[%c0_32, %c0_33] : memref<1x128xf32, #tpu.memory_space<vmem>>, vector<1x128xf32>
    %217 = vector.shape_cast %216 : vector<1x128xf32> to vector<1x1x128xf32>
    %218 = vector.broadcast %217 : vector<1x1x128xf32> to vector<4x16x128xf32>
    %219 = arith.mulf %215, %218 : vector<4x16x128xf32>
    %c0_34 = arith.constant 0 : index
    %c0_35 = arith.constant 0 : index
    %220 = vector.load %arg8[%c0_34, %c0_35] : memref<1x128xf32, #tpu.memory_space<vmem>>, vector<1x128xf32>
    %221 = vector.shape_cast %220 : vector<1x128xf32> to vector<1x1x128xf32>
    %222 = vector.broadcast %221 : vector<1x1x128xf32> to vector<4x16x128xf32>
    %223 = arith.addf %219, %222 : vector<4x16x128xf32>
    %cst_36 = arith.constant 0.000000e+00 : f32
    %224 = vector.broadcast %cst_36 : f32 to vector<4x16x128xf32>
    %225 = arith.maximumf %223, %224 : vector<4x16x128xf32>
    %226 = arith.truncf %225 : vector<4x16x128xf32> to vector<4x16x128xbf16>
    %c0_37 = arith.constant 0 : index
    %c0_38 = arith.constant 0 : index
    %c0_39 = arith.constant 0 : index
    %c0_40 = arith.constant 0 : index
    %227 = vector.load %arg9[%c0_37, %c0_38, %c0_39, %c0_40] : memref<1x4x16x128xbf16, #tpu.memory_space<vmem>>, vector<1x4x16x128xbf16>
    %228 = vector.shape_cast %227 : vector<1x4x16x128xbf16> to vector<4x16x128xbf16>
    %229 = vector.shape_cast %226 : vector<4x16x128xbf16> to vector<1x4x16x128xbf16>
    tpu.vector_store %arg9[%c0_37, %c0_38, %c0_39, %c0_40], %229 {strides = array<i32>} : memref<1x4x16x128xbf16, #tpu.memory_space<vmem>>, vector<1x4x16x128xbf16>,
    return
  }
  func.func @transform_0(%arg0: i32, %arg1: i32) -> (i32, i32, i32) {
    %c0_i32 = arith.constant 0 : i32
    %c0_i32_0 = arith.constant 0 : i32
    %c0_i32_1 = arith.constant 0 : i32
    return %arg0, %c0_i32, %c0_i32_0 : i32, i32, i32
  }
  func.func @transform_1(%arg0: i32, %arg1: i32) -> (i32, i32) {
    %c0_i32 = arith.constant 0 : i32
    %c0_i32_0 = arith.constant 0 : i32
    %c0_i32_1 = arith.constant 0 : i32
    return %c0_i32, %c0_i32_0 : i32, i32
  }
  func.func @transform_2(%arg0: i32, %arg1: i32) -> (i32, i32) {
    %c0_i32 = arith.constant 0 : i32
    %c0_i32_0 = arith.constant 0 : i32
    %c0_i32_1 = arith.constant 0 : i32
    return %c0_i32, %c0_i32_0 : i32, i32
  }
  func.func @transform_3(%arg0: i32, %arg1: i32) -> (i32, i32) {
    %c0_i32 = arith.constant 0 : i32
    %c0_i32_0 = arith.constant 0 : i32
    %c0_i32_1 = arith.constant 0 : i32
    return %c0_i32, %c0_i32_0 : i32, i32
  }
  func.func @transform_4(%arg0: i32, %arg1: i32) -> (i32, i32) {
    %c0_i32 = arith.constant 0 : i32
    %c0_i32_0 = arith.constant 0 : i32
    %c0_i32_1 = arith.constant 0 : i32
    return %c0_i32, %c0_i32_0 : i32, i32
  }
  func.func @transform_5(%arg0: i32, %arg1: i32) -> (i32, i32) {
    %c0_i32 = arith.constant 0 : i32
    %c0_i32_0 = arith.constant 0 : i32
    %c0_i32_1 = arith.constant 0 : i32
    return %c0_i32, %c0_i32_0 : i32, i32
  }
  func.func @transform_6(%arg0: i32, %arg1: i32) -> (i32, i32) {
    %c0_i32 = arith.constant 0 : i32
    %c0_i32_0 = arith.constant 0 : i32
    %c0_i32_1 = arith.constant 0 : i32
    return %c0_i32, %c0_i32_0 : i32, i32
  }
  func.func @transform_7(%arg0: i32, %arg1: i32) -> (i32, i32, i32, i32) {
    %c0_i32 = arith.constant 0 : i32
    %c0_i32_0 = arith.constant 0 : i32
    %c0_i32_1 = arith.constant 0 : i32
    return %arg0, %arg1, %c0_i32, %c0_i32_0 : i32, i32, i32, i32
  }
}

</mosaic_0001>

<llo_original>
// kernel: light_conv_bn_act.1
$region0: #{light_conv_bn_act.1}
  #allocation0 [shape = 'u32[]', space=smem, size = 0x4, offset = 0x4, fixed_abs, tag = 'smem constant byte address 0x4 - core index']
  #allocation1 [shape = 'u32[144,128]{1,0:T(1,128)}', space=vmem, size = 0x12000, scoped, tag = 'internal scratch']
  #allocation2 [shape = 'f32[20,32,128]{2,1,0:T(8,128)}', space=vmem, size = 0x50000, scoped, tag = 'scratch operand']
  %s0 = inlined_call_operand.vmem [shape: bf16[2,256,16], index: 0, kind: input, shape index: {}]
  %s1 = inlined_call_operand.vmem [shape: bf16[16,128], index: 1, kind: input, shape index: {}]
  %s2 = inlined_call_operand.vmem [shape: f32[1,128], index: 2, kind: input, shape index: {}]
  %s3 = inlined_call_operand.vmem [shape: f32[1,128], index: 3, kind: input, shape index: {}]
  %s4 = inlined_call_operand.vmem [shape: f32[25,128], index: 4, kind: input, shape index: {}]
  %s5 = inlined_call_operand.vmem [shape: f32[1,128], index: 5, kind: input, shape index: {}]
  %s6 = inlined_call_operand.vmem [shape: f32[1,128], index: 6, kind: input, shape index: {}]
  %s7 = inlined_call_operand.vmem [shape: bf16[2,16,16,128], index: 7, kind: output, shape index: {}]
  %s8 = sld [smem:[#allocation0]]
  $region65: #{light_conv_bn_act.1} parent=0
    _
  %s10 = ssub.s32 1, %s8
  %s11 = scalar_select 0, %s10, %s8
  loop: start=0, step=1, limit=10
  $region2: #{light_conv_bn_act.1} parent=0 // loop_pre_header
    _
  $region3: #{light_conv_bn_act.1} parent=0 // loop_header
    %s13 = sphi 0, %s17
    %p14 = scmp.ge.s32.totalorder %s13, 10
    %s20 = sphi 0, %s32
    %s21 = sphi 0, %s28
    %s22 = sphi 0, %s20
    %s23 = sphi 0, %s21
    %s24 = sphi 0, %s22
    %s25 = sphi 0, %s23
    %s35 = sphi 0, %s37
    %s38 = sphi 0, %s35
    %s39 = sphi 0, %s38
    %s55 = sphi 0, %s39
    %s59 = sphi 0, %s59
    %s61 = sphi 0, %s59
    %s62 = sphi 0, %s61
    %s76 = sphi 0, %s62
    %s80 = sphi 0, %s80
    %s82 = sphi 0, %s80
    %s83 = sphi 0, %s82
    %s97 = sphi 0, %s83
    %s101 = sphi 0, %s101
    %s103 = sphi 0, %s101
    %s104 = sphi 0, %s103
    %s118 = sphi 0, %s104
    %s122 = sphi 0, %s122
    %s124 = sphi 0, %s122
    %s125 = sphi 0, %s124
    %s139 = sphi 0, %s125
    %s143 = sphi 0, %s143
    %s145 = sphi 0, %s143
    %s146 = sphi 0, %s145
    %s160 = sphi 0, %s146
    %s164 = sphi 0, %s164
    %s166 = sphi 0, %s164
    %s167 = sphi 0, %s166
    %s181 = sphi 0, %s167
    %s189 = sphi 0, %s191
    %s192 = sphi 0, %s189
    %s193 = sphi 0, %s192
    %s209 = sphi 0, %s193
  $region4: #{light_conv_bn_act.1} parent=0 // loop_header_branch
    %16 = sbr.rel (%p14) target = $region8
  $region5: #{light_conv_bn_act.1} parent=0 // loop_body
    %s18 = ssub.s32 %s13, 1
    %s19 = ssub.s32 %s13, 2
    %s26 = sadd.s32 1, %s21
    %p27 = scmp.ge.s32.totalorder %s26, 4
    %s28 = scalar_select %p27, 0, %s26
    %s29 = sadd.s32 1, %s20
    %s30 = scalar_select %p27, %s29, %s20
    %p31 = scmp.ge.s32.totalorder %s30, 2
    %s32 = scalar_select %p31, 0, %s30
    %s33 = ssub.s32 %s20, %s32
    %p34 = scmp.eq.s32.totalorder %s33, 0
    %s36 = sadd.s32 %s35, 1
    %s37 = scalar_select %p34, %s35, %s36
    %p40 = pneg %p34
    %p41 = scmp.eq.s32.totalorder %s13, 7
    %p42 = por %p40, %p41
    %p43 = scmp.ne.s32.totalorder %s35, %s38
    %p44 = scmp.eq.s32.totalorder %s13, 0
    %p45 = por %p43, %p44
    %p46 = scmp.ne.s32.totalorder %s35, %s38
    %p47 = scmp.eq.s32.totalorder %s18, 7
    %p48 = por %p46, %p47
    %p49 = scmp.ne.s32.totalorder %s38, %s39
    %p50 = scmp.eq.s32.totalorder %s18, 0
    %p51 = por %p49, %p50
    %p52 = scmp.ne.s32.totalorder %s38, %s39
    %p53 = scmp.eq.s32.totalorder %s19, 7
    %p54 = por %p52, %p53
    %p56 = scmp.ne.s32.totalorder %s39, %s55
    %p57 = scmp.eq.s32.totalorder %s19, 0
    %p58 = por %p56, %p57
    %s60 = sadd.s32 %s59, 1
    %p63 = scmp.eq.s32.totalorder %s13, 7
    %p64 = scmp.ne.s32.totalorder %s59, %s61
    %p65 = scmp.eq.s32.totalorder %s13, 0
    %p66 = por %p64, %p65
    %p67 = scmp.ne.s32.totalorder %s59, %s61
    %p68 = scmp.eq.s32.totalorder %s18, 7
    %p69 = por %p67, %p68
    %p70 = scmp.ne.s32.totalorder %s61, %s62
    %p71 = scmp.eq.s32.totalorder %s18, 0
    %p72 = por %p70, %p71
    %p73 = scmp.ne.s32.totalorder %s61, %s62
    %p74 = scmp.eq.s32.totalorder %s19, 7
    %p75 = por %p73, %p74
    %p77 = scmp.ne.s32.totalorder %s62, %s76
    %p78 = scmp.eq.s32.totalorder %s19, 0
    %p79 = por %p77, %p78
    %s81 = sadd.s32 %s80, 1
    %p84 = scmp.eq.s32.totalorder %s13, 7
    %p85 = scmp.ne.s32.totalorder %s80, %s82
    %p86 = scmp.eq.s32.totalorder %s13, 0
    %p87 = por %p85, %p86
    %p88 = scmp.ne.s32.totalorder %s80, %s82
    %p89 = scmp.eq.s32.totalorder %s18, 7
    %p90 = por %p88, %p89
    %p91 = scmp.ne.s32.totalorder %s82, %s83
    %p92 = scmp.eq.s32.totalorder %s18, 0
    %p93 = por %p91, %p92
    %p94 = scmp.ne.s32.totalorder %s82, %s83
    %p95 = scmp.eq.s32.totalorder %s19, 7
    %p96 = por %p94, %p95
    %p98 = scmp.ne.s32.totalorder %s83, %s97
    %p99 = scmp.eq.s32.totalorder %s19, 0
    %p100 = por %p98, %p99
    %s102 = sadd.s32 %s101, 1
    %p105 = scmp.eq.s32.totalorder %s13, 7
    %p106 = scmp.ne.s32.totalorder %s101, %s103
    %p107 = scmp.eq.s32.totalorder %s13, 0
    %p108 = por %p106, %p107
    %p109 = scmp.ne.s32.totalorder %s101, %s103
    %p110 = scmp.eq.s32.totalorder %s18, 7
    %p111 = por %p109, %p110
    %p112 = scmp.ne.s32.totalorder %s103, %s104
    %p113 = scmp.eq.s32.totalorder %s18, 0
    %p114 = por %p112, %p113
    %p115 = scmp.ne.s32.totalorder %s103, %s104
    %p116 = scmp.eq.s32.totalorder %s19, 7
    %p117 = por %p115, %p116
    %p119 = scmp.ne.s32.totalorder %s104, %s118
    %p120 = scmp.eq.s32.totalorder %s19, 0
    %p121 = por %p119, %p120
    %s123 = sadd.s32 %s122, 1
    %p126 = scmp.eq.s32.totalorder %s13, 7
    %p127 = scmp.ne.s32.totalorder %s122, %s124
    %p128 = scmp.eq.s32.totalorder %s13, 0
    %p129 = por %p127, %p128
    %p130 = scmp.ne.s32.totalorder %s122, %s124
    %p131 = scmp.eq.s32.totalorder %s18, 7
    %p132 = por %p130, %p131
    %p133 = scmp.ne.s32.totalorder %s124, %s125
    %p134 = scmp.eq.s32.totalorder %s18, 0
    %p135 = por %p133, %p134
    %p136 = scmp.ne.s32.totalorder %s124, %s125
    %p137 = scmp.eq.s32.totalorder %s19, 7
    %p138 = por %p136, %p137
    %p140 = scmp.ne.s32.totalorder %s125, %s139
    %p141 = scmp.eq.s32.totalorder %s19, 0
    %p142 = por %p140, %p141
    %s144 = sadd.s32 %s143, 1
    %p147 = scmp.eq.s32.totalorder %s13, 7
    %p148 = scmp.ne.s32.totalorder %s143, %s145
    %p149 = scmp.eq.s32.totalorder %s13, 0
    %p150 = por %p148, %p149
    %p151 = scmp.ne.s32.totalorder %s143, %s145
    %p152 = scmp.eq.s32.totalorder %s18, 7
    %p153 = por %p151, %p152
    %p154 = scmp.ne.s32.totalorder %s145, %s146
    %p155 = scmp.eq.s32.totalorder %s18, 0
    %p156 = por %p154, %p155
    %p157 = scmp.ne.s32.totalorder %s145, %s146
    %p158 = scmp.eq.s32.totalorder %s19, 7
    %p159 = por %p157, %p158
    %p161 = scmp.ne.s32.totalorder %s146, %s160
    %p162 = scmp.eq.s32.totalorder %s19, 0
    %p163 = por %p161, %p162
    %s165 = sadd.s32 %s164, 1
    %p168 = scmp.eq.s32.totalorder %s13, 7
    %p169 = scmp.ne.s32.totalorder %s164, %s166
    %p170 = scmp.eq.s32.totalorder %s13, 0
    %p171 = por %p169, %p170
    %p172 = scmp.ne.s32.totalorder %s164, %s166
    %p173 = scmp.eq.s32.totalorder %s18, 7
    %p174 = por %p172, %p173
    %p175 = scmp.ne.s32.totalorder %s166, %s167
    %p176 = scmp.eq.s32.totalorder %s18, 0
    %p177 = por %p175, %p176
    %p178 = scmp.ne.s32.totalorder %s166, %s167
    %p179 = scmp.eq.s32.totalorder %s19, 7
    %p180 = por %p178, %p179
    %p182 = scmp.ne.s32.totalorder %s167, %s181
    %p183 = scmp.eq.s32.totalorder %s19, 0
    %p184 = por %p182, %p183
    %s185 = ssub.s32 %s20, %s32
    %s186 = ssub.s32 %s21, %s28
    %s187 = sor.u32 %s185, %s186
    %p188 = scmp.eq.s32.totalorder %s187, 0
    %s190 = sadd.s32 %s189, 1
    %s191 = scalar_select %p188, %s189, %s190
    %p194 = pneg %p188
    %p195 = scmp.eq.s32.totalorder %s13, 7
    %p196 = por %p194, %p195
    %p197 = scmp.ne.s32.totalorder %s189, %s192
    %p198 = scmp.eq.s32.totalorder %s13, 0
    %p199 = por %p197, %p198
    %p200 = scmp.ne.s32.totalorder %s189, %s192
    %p201 = scmp.eq.s32.totalorder %s18, 7
    %p202 = por %p200, %p201
    %p203 = scmp.ne.s32.totalorder %s192, %s193
    %p204 = scmp.eq.s32.totalorder %s18, 0
    %p205 = por %p203, %p204
    %p206 = scmp.ne.s32.totalorder %s192, %s193
    %p207 = scmp.eq.s32.totalorder %s19, 7
    %p208 = por %p206, %p207
    %p210 = scmp.ne.s32.totalorder %s193, %s209
    %p211 = scmp.eq.s32.totalorder %s19, 0
    %p212 = por %p210, %p211
    %p213 = scmp.le.s32.totalorder 1, %s13
    %p214 = scmp.lt.s32.totalorder %s13, 9
    %p215 = pnand %p213, %p214
    %p216 = pneg %p215
    // Predicated region
    $region9: #{light_conv_bn_act.1} parent=5 // pred_check
      _
    $region10: #{light_conv_bn_act.1} parent=5 // pred_check_branch
      %218 = sbr.rel (%p215) target = $region12
    $region11: #{light_conv_bn_act.1} parent=5 // pred_region
      %s219 = ssub.s32 %s13, 1
      // Predicated region
      $region13: #{light_conv_bn_act.1} parent=11 // pred_check
        %p220 = pneg %p72
      $region14: #{light_conv_bn_act.1} parent=11 // pred_check_branch
        %222 = sbr.rel (%p220) target = $region16
      $region15: #{light_conv_bn_act.1} parent=11 // pred_region
        _
      $region16: #{light_conv_bn_act.1} parent=11 // pred_fallthru
        _
      // Predicated region
      $region17: #{light_conv_bn_act.1} parent=11 // pred_check
        %p223 = pneg %p93
      $region18: #{light_conv_bn_act.1} parent=11 // pred_check_branch
        %225 = sbr.rel (%p223) target = $region20
      $region19: #{light_conv_bn_act.1} parent=11 // pred_region
        _
      $region20: #{light_conv_bn_act.1} parent=11 // pred_fallthru
        _
      // Predicated region
      $region21: #{light_conv_bn_act.1} parent=11 // pred_check
        %p226 = pneg %p114
      $region22: #{light_conv_bn_act.1} parent=11 // pred_check_branch
        %228 = sbr.rel (%p226) target = $region24
      $region23: #{light_conv_bn_act.1} parent=11 // pred_region
        _
      $region24: #{light_conv_bn_act.1} parent=11 // pred_fallthru
        _
      // Predicated region
      $region25: #{light_conv_bn_act.1} parent=11 // pred_check
        %p229 = pneg %p135
      $region26: #{light_conv_bn_act.1} parent=11 // pred_check_branch
        %231 = sbr.rel (%p229) target = $region28
      $region27: #{light_conv_bn_act.1} parent=11 // pred_region
        _
      $region28: #{light_conv_bn_act.1} parent=11 // pred_fallthru
        _
      // Predicated region
      $region29: #{light_conv_bn_act.1} parent=11 // pred_check
        %p232 = pneg %p156
      $region30: #{light_conv_bn_act.1} parent=11 // pred_check_branch
        %234 = sbr.rel (%p232) target = $region32
      $region31: #{light_conv_bn_act.1} parent=11 // pred_region
        _
      $region32: #{light_conv_bn_act.1} parent=11 // pred_fallthru
        _
      // Predicated region
      $region33: #{light_conv_bn_act.1} parent=11 // pred_check
        %p235 = pneg %p177
      $region34: #{light_conv_bn_act.1} parent=11 // pred_check_branch
        %237 = sbr.rel (%p235) target = $region36
      $region35: #{light_conv_bn_act.1} parent=11 // pred_region
        _
      $region36: #{light_conv_bn_act.1} parent=11 // pred_fallthru
        _
    $region12: #{light_conv_bn_act.1} parent=5 // pred_fallthru
      _
    %p238 = scmp.lt.s32.totalorder %s13, 8
    // Predicated region
    $region37: #{light_conv_bn_act.1} parent=5 // pred_check
      %p239 = pneg %p238
    $region38: #{light_conv_bn_act.1} parent=5 // pred_check_branch
      %241 = sbr.rel (%p239) target = $region40
    $region39: #{light_conv_bn_act.1} parent=5 // pred_region
      // Predicated region
      $region41: #{light_conv_bn_act.1} parent=39 // pred_check
        %p242 = pneg %p45
      $region42: #{light_conv_bn_act.1} parent=39 // pred_check_branch
        %244 = sbr.rel (%p242) target = $region44
      $region43: #{light_conv_bn_act.1} parent=39 // pred_region
        %p245 = scmp.lt.s32.totalorder %s20, 1
        %s246 = scalar_select %p245, %s20, 1
        %s247 = smul.addr %s246, 32
        %s248 = smul.addr %s247, 4
        %s249 = scalar_lea.vmem %s0, %s248
      $region44: #{light_conv_bn_act.1} parent=39 // pred_fallthru
        _
    $region40: #{light_conv_bn_act.1} parent=5 // pred_fallthru
      _
    %p250 = scmp.le.s32.totalorder 1, %s13
    %p251 = scmp.lt.s32.totalorder %s13, 9
    %p252 = pnand %p250, %p251
    %p253 = pneg %p252
    // Predicated region
    $region45: #{light_conv_bn_act.1} parent=5 // pred_check
      _
    $region46: #{light_conv_bn_act.1} parent=5 // pred_check_branch
      %255 = sbr.rel (%p252) target = $region48
    $region47: #{light_conv_bn_act.1} parent=5 // pred_region
      %s256 = ssub.s32 %s13, 1
      %p257 = scmp.lt.s32.totalorder %s22, 1
      %s258 = scalar_select %p257, %s22, 1
      %s259 = smul.addr %s258, 32
      %s260 = smul.addr %s259, 4
      %s261 = scalar_lea.vmem %s0, %s260
      %p262 = pneg %p51
      %p263 = pneg %p48
      %p264 = pneg %p72
      %p265 = pneg %p69
      %p266 = pneg %p93
      %p267 = pneg %p90
      %p268 = pneg %p114
      %p269 = pneg %p111
      %p270 = pneg %p135
      %p271 = pneg %p132
      %p272 = pneg %p156
      %p273 = pneg %p153
      %p274 = pneg %p177
      %p275 = pneg %p174
      %p276 = pneg %p205
      %p277 = pneg %p202
      %s278 = smul.u32 4, %s23
      %p279 = scmp.lt.s32.totalorder %s22, 1
      %s280 = scalar_select %p279, %s22, 1
      %p281 = scmp.lt.s32.totalorder %s278, 15
      %s282 = scalar_select %p281, %s278, 15
      %s283 = smul.addr %s282, 2
      %s284 = smul.addr %s280, 32
      %s285 = sadd.s32 %s283, %s284
      %s286 = smul.addr %s285, 4
      %s287 = scalar_lea.vmem %s7, %s286
      %p288 = scmp.lt.s32.totalorder %s22, 1
      %s289 = scalar_select %p288, %s22, 1
      %s290 = smul.addr %s289, 32
      %s291 = smul.addr %s290, 4
      %s292 = scalar_lea.vmem %s0, %s291
      %s293 = smul.u32 4, %s23
      %p294 = scmp.lt.s32.totalorder %s22, 1
      %s295 = scalar_select %p294, %s22, 1
      %p296 = scmp.lt.s32.totalorder %s293, 15
      %s297 = scalar_select %p296, %s293, 15
      %s298 = smul.addr %s297, 2
      %s299 = smul.addr %s295, 32
      %s300 = sadd.s32 %s298, %s299
      %s301 = smul.addr %s300, 4
      %s302 = scalar_lea.vmem %s7, %s301
      %s303 = smul.u32 4, %s23
      %p305 = scmp.eq.s32.totalorder %s23, 0
      // Predicated region
      $region49: #{light_conv_bn_act.1} parent=47 // pred_check
        %p306 = pneg %p305
      $region50: #{light_conv_bn_act.1} parent=47 // pred_check_branch
        %308 = sbr.rel (%p306) target = $region52
      $region51: #{light_conv_bn_act.1} parent=47 // pred_region
        %309 = vst [vmem:[#allocation2] sm:$0xff] 0.0
        %310 = vst [vmem:[#allocation2 + $0x8] sm:$0xff] 0.0
        %311 = vst [vmem:[#allocation2 + $0x10] sm:$0xff] 0.0
        %312 = vst [vmem:[#allocation2 + $0x18] sm:$0xff] 0.0
        %313 = vst [vmem:[#allocation2 + $0x20] sm:$0xff] 0.0
        %314 = vst [vmem:[#allocation2 + $0x28] sm:$0xff] 0.0
        %315 = vst [vmem:[#allocation2 + $0x30] sm:$0xff] 0.0
        %316 = vst [vmem:[#allocation2 + $0x38] sm:$0xff] 0.0
        %s317 = scalar_lea.vmem [#allocation2], 576
        %318 = vst [vmem:[%s317] sm:$0xff] 0.0
        %319 = vst [vmem:[%s317 + $0x8] sm:$0xff] 0.0
        %320 = vst [vmem:[%s317 + $0x10] sm:$0xff] 0.0
        %321 = vst [vmem:[%s317 + $0x18] sm:$0xff] 0.0
        %322 = vst [vmem:[%s317 + $0x20] sm:$0xff] 0.0
        %323 = vst [vmem:[%s317 + $0x28] sm:$0xff] 0.0
        %324 = vst [vmem:[%s317 + $0x30] sm:$0xff] 0.0
        %325 = vst [vmem:[%s317 + $0x38] sm:$0xff] 0.0
        %s326 = scalar_lea.vmem [#allocation2], 64
        %327 = vst [vmem:[%s326] sm:$0xff] 0.0
        %328 = vst [vmem:[%s326 + $0x20] sm:$0xff] 0.0
        %329 = vst [vmem:[%s326 + $0x40] sm:$0xff] 0.0
        %330 = vst [vmem:[%s326 + $0x60] sm:$0xff] 0.0
        %331 = vst [vmem:[%s326 + $0x80] sm:$0xff] 0.0
        %332 = vst [vmem:[%s326 + $0xa0] sm:$0xff] 0.0
        %333 = vst [vmem:[%s326 + $0xc0] sm:$0xff] 0.0
        %334 = vst [vmem:[%s326 + $0xe0] sm:$0xff] 0.0
        %335 = vst [vmem:[%s326 + $0x100] sm:$0xff] 0.0
        %336 = vst [vmem:[%s326 + $0x120] sm:$0xff] 0.0
        %337 = vst [vmem:[%s326 + $0x140] sm:$0xff] 0.0
        %338 = vst [vmem:[%s326 + $0x160] sm:$0xff] 0.0
        %339 = vst [vmem:[%s326 + $0x180] sm:$0xff] 0.0
        %340 = vst [vmem:[%s326 + $0x1a0] sm:$0xff] 0.0
        %341 = vst [vmem:[%s326 + $0x1c0] sm:$0xff] 0.0
        %342 = vst [vmem:[%s326 + $0x1e0] sm:$0xff] 0.0
        %343 = vst [vmem:[%s326 + $0x18] sm:$0xff] 0.0
        %344 = vst [vmem:[%s326 + $0x38] sm:$0xff] 0.0
        %345 = vst [vmem:[%s326 + $0x58] sm:$0xff] 0.0
        %346 = vst [vmem:[%s326 + $0x78] sm:$0xff] 0.0
        %347 = vst [vmem:[%s326 + $0x98] sm:$0xff] 0.0
        %348 = vst [vmem:[%s326 + $0xb8] sm:$0xff] 0.0
        %349 = vst [vmem:[%s326 + $0xd8] sm:$0xff] 0.0
        %350 = vst [vmem:[%s326 + $0xf8] sm:$0xff] 0.0
        %351 = vst [vmem:[%s326 + $0x118] sm:$0xff] 0.0
        %352 = vst [vmem:[%s326 + $0x138] sm:$0xff] 0.0
        %353 = vst [vmem:[%s326 + $0x158] sm:$0xff] 0.0
        %354 = vst [vmem:[%s326 + $0x178] sm:$0xff] 0.0
        %355 = vst [vmem:[%s326 + $0x198] sm:$0xff] 0.0
        %356 = vst [vmem:[%s326 + $0x1b8] sm:$0xff] 0.0
        %357 = vst [vmem:[%s326 + $0x1d8] sm:$0xff] 0.0
        %358 = vst [vmem:[%s326 + $0x1f8] sm:$0xff] 0.0
        %v359 = vld [vmem:[%s1] sm:$0xf]
        %v360 = vld [vmem:[%s1 + $0x4] sm:$0xf]
        %v361 = vld [vmem:[%s2] sm:$0x1]
        %v362 = vld [vmem:[%s3] sm:$0x1]
        %v363 = vld [vmem:[%s292] sm:$0xf]
        %v364 = vld [vmem:[%s292 + $0x4] sm:$0xf]
        %v365 = vld [vmem:[%s292 + $0x8] sm:$0xf]
        %v366 = vld [vmem:[%s292 + $0xc] sm:$0xf]
        %v367 = vld [vmem:[%s292 + $0x10] sm:$0xf]
        %v368 = vld [vmem:[%s292 + $0x14] sm:$0xf]
        %v369 = vld [vmem:[%s292 + $0x18] sm:$0xf]
        %v370 = vld [vmem:[%s292 + $0x1c] sm:$0xf]
        %v379 = vunpack.c.l.b16 %v363
        %v380 = vunpack.c.l.b16 %v364
        %v381 = vunpack.c.l.b16 %v365
        %v382 = vunpack.c.l.b16 %v366
        %v383 = vunpack.c.l.b16 %v367
        %v384 = vunpack.c.l.b16 %v368
        %v385 = vunpack.c.l.b16 %v369
        %v386 = vunpack.c.l.b16 %v370
        %v387 = vpack.c.b16 %v380, %v379
        %v388 = vpack.c.b16 %v382, %v381
        %v389 = vpack.c.b16 %v384, %v383
        %v390 = vpack.c.b16 %v386, %v385
        %v393 = vunpack.c.l.b16 %v359
        %v394 = vunpack.c.l.b16 %v360
        %v395 = vpack.c.b16 %v394, %v393
        %vm397 = vcmask 130048
        %v399 = vsel %vm397, %v387, 0
        %v402 = vsel %vm397, %v388, 0
        %v405 = vsel %vm397, %v389, 0
        %v408 = vsel %vm397, %v390, 0
        %410 = vmatprep.subr.bf16.mxu0 0
        %411 = vmatpush1.bf16.msra.mxu0 0
        %412 = vmatprep.subr.bf16.mxu0 0
        %413 = vmatpush1.bf16.msra.mxu0 0
        %414 = vmatprep.subr.bf16.mxu0 0
        %415 = vmatpush1.bf16.msra.mxu0 0
        %416 = vmatprep.subr.bf16.mxu0 0
        %417 = vmatpush1.bf16.msra.mxu0 0
        %418 = vmatprep.subr.bf16.mxu0 0
        %419 = vmatpush1.bf16.msra.mxu0 0
        %420 = vmatprep.subr.bf16.mxu0 0
        %421 = vmatpush1.bf16.msra.mxu0 0
        %422 = vmatprep.subr.bf16.mxu0 0
        %423 = vmatpush1.bf16.msra.mxu0 0
        %424 = vmatprep.subr.bf16.mxu0 0
        %425 = vmatpush1.bf16.msra.mxu0 %v395
        %426 = vmatprep.subr.bf16.mxu0 0
        %427 = vmatpush2.bf16.msra.mxu0 0
        %428 = vmatprep.subr.bf16.mxu0 0
        %429 = vmatpush2.bf16.msra.mxu0 0
        %430 = vmatprep.subr.bf16.mxu0 0
        %431 = vmatpush2.bf16.msra.mxu0 0
        %432 = vmatprep.subr.bf16.mxu0 0
        %433 = vmatpush2.bf16.msra.mxu0 0
        %434 = vmatprep.subr.bf16.mxu0 0
        %435 = vmatpush2.bf16.msra.mxu0 0
        %436 = vmatprep.subr.bf16.mxu0 0
        %437 = vmatpush2.bf16.msra.mxu0 0
        %438 = vmatprep.subr.bf16.mxu0 0
        %439 = vmatpush2.bf16.msra.mxu0 0
        %440 = vmatprep.subr.bf16.mxu0 0
        %441 = vmatpush2.bf16.msra.mxu0 0
        %442 = vmatprep.mubr.bf16.mxu0 0
        %443 = vmatmul.mubr.bf16.gmra.mxu0 %v399
        %v444 = vpop.f32.mrf.mxu0
        %v445 = vadd.f32 0.0, %v444
        %v446 = vpop.f32.mrf.mxu0
        %v447 = vpop.f32.mrf.mxu0
        %v448 = vadd.f32 0.0, %v447
        %v449 = vpop.f32.mrf.mxu0
        %450 = vmatprep.mubr.bf16.mxu0 0
        %451 = vmatmul.mubr.bf16.gmra.mxu0 %v402
        %v452 = vpop.f32.mrf.mxu0
        %v453 = vadd.f32 0.0, %v452
        %v454 = vpop.f32.mrf.mxu0
        %v455 = vpop.f32.mrf.mxu0
        %v456 = vadd.f32 0.0, %v455
        %v457 = vpop.f32.mrf.mxu0
        %458 = vmatprep.mubr.bf16.mxu0 0
        %459 = vmatmul.mubr.bf16.gmra.mxu0 %v405
        %v460 = vpop.f32.mrf.mxu0
        %v461 = vadd.f32 0.0, %v460
        %v462 = vpop.f32.mrf.mxu0
        %v463 = vpop.f32.mrf.mxu0
        %v464 = vadd.f32 0.0, %v463
        %v465 = vpop.f32.mrf.mxu0
        %466 = vmatprep.mubr.bf16.mxu0 0
        %467 = vmatmul.mubr.bf16.gmra.mxu0 %v408
        %v468 = vpop.f32.mrf.mxu0
        %v469 = vadd.f32 0.0, %v468
        %v470 = vpop.f32.mrf.mxu0
        %v471 = vpop.f32.mrf.mxu0
        %v472 = vadd.f32 0.0, %v471
        %v473 = vpop.f32.mrf.mxu0
        %474 = vdwg.mxu0
        %v476 = vlaneseq
        %v477 = vshrl.u32 %v476, 7
        %v478 = vsub.s32 0, %v477
        %v479 = vrot.slane %v361, %v478
        %v481 = vmul.f32 %v445, %v479
        %v482 = vmul.f32 %v448, %v479
        %v483 = vmul.f32 %v453, %v479
        %v484 = vmul.f32 %v456, %v479
        %v485 = vmul.f32 %v461, %v479
        %v486 = vmul.f32 %v464, %v479
        %v487 = vmul.f32 %v469, %v479
        %v488 = vmul.f32 %v472, %v479
        %v490 = vlaneseq
        %v491 = vshrl.u32 %v490, 7
        %v492 = vsub.s32 0, %v491
        %v493 = vrot.slane %v362, %v492
        %v495 = vadd.f32 %v481, %v493
        %v496 = vadd.f32 %v482, %v493
        %v497 = vadd.f32 %v483, %v493
        %v498 = vadd.f32 %v484, %v493
        %v499 = vadd.f32 %v485, %v493
        %v500 = vadd.f32 %v486, %v493
        %v501 = vadd.f32 %v487, %v493
        %v502 = vadd.f32 %v488, %v493
        %503 = vst [vmem:[%s326 + $0x8] sm:$0xff] %v495
        %504 = vst [vmem:[%s326 + $0x10] sm:$0xff] %v496
        %505 = vst [vmem:[%s326 + $0x28] sm:$0xff] %v497
        %506 = vst [vmem:[%s326 + $0x30] sm:$0xff] %v498
        %507 = vst [vmem:[%s326 + $0x48] sm:$0xff] %v499
        %508 = vst [vmem:[%s326 + $0x50] sm:$0xff] %v500
        %509 = vst [vmem:[%s326 + $0x68] sm:$0xff] %v501
        %510 = vst [vmem:[%s326 + $0x70] sm:$0xff] %v502
        %s511 = scalar_lea.vmem %s292, 32
        %v512 = vld [vmem:[%s511] sm:$0xf]
        %v513 = vld [vmem:[%s511 + $0x4] sm:$0xf]
        %v514 = vld [vmem:[%s511 + $0x8] sm:$0xf]
        %v515 = vld [vmem:[%s511 + $0xc] sm:$0xf]
        %v516 = vld [vmem:[%s511 + $0x10] sm:$0xf]
        %v517 = vld [vmem:[%s511 + $0x14] sm:$0xf]
        %v518 = vld [vmem:[%s511 + $0x18] sm:$0xf]
        %v519 = vld [vmem:[%s511 + $0x1c] sm:$0xf]
        %v528 = vunpack.c.l.b16 %v512
        %v529 = vunpack.c.l.b16 %v513
        %v530 = vunpack.c.l.b16 %v514
        %v531 = vunpack.c.l.b16 %v515
        %v532 = vunpack.c.l.b16 %v516
        %v533 = vunpack.c.l.b16 %v517
        %v534 = vunpack.c.l.b16 %v518
        %v535 = vunpack.c.l.b16 %v519
        %v536 = vpack.c.b16 %v529, %v528
        %v537 = vpack.c.b16 %v531, %v530
        %v538 = vpack.c.b16 %v533, %v532
        %v539 = vpack.c.b16 %v535, %v534
        %v541 = vsel %vm397, %v536, 0
        %v544 = vsel %vm397, %v537, 0
        %v547 = vsel %vm397, %v538, 0
        %v550 = vsel %vm397, %v539, 0
        %552 = vmatprep.subr.bf16.mxu0 0
        %553 = vmatpush1.bf16.msra.mxu0 0
        %554 = vmatprep.subr.bf16.mxu0 0
        %555 = vmatpush1.bf16.msra.mxu0 0
        %556 = vmatprep.subr.bf16.mxu0 0
        %557 = vmatpush1.bf16.msra.mxu0 0
        %558 = vmatprep.subr.bf16.mxu0 0
        %559 = vmatpush1.bf16.msra.mxu0 0
        %560 = vmatprep.subr.bf16.mxu0 0
        %561 = vmatpush1.bf16.msra.mxu0 0
        %562 = vmatprep.subr.bf16.mxu0 0
        %563 = vmatpush1.bf16.msra.mxu0 0
        %564 = vmatprep.subr.bf16.mxu0 0
        %565 = vmatpush1.bf16.msra.mxu0 0
        %566 = vmatprep.subr.bf16.mxu0 0
        %567 = vmatpush1.bf16.msra.mxu0 %v395
        %568 = vmatprep.subr.bf16.mxu0 0
        %569 = vmatpush2.bf16.msra.mxu0 0
        %570 = vmatprep.subr.bf16.mxu0 0
        %571 = vmatpush2.bf16.msra.mxu0 0
        %572 = vmatprep.subr.bf16.mxu0 0
        %573 = vmatpush2.bf16.msra.mxu0 0
        %574 = vmatprep.subr.bf16.mxu0 0
        %575 = vmatpush2.bf16.msra.mxu0 0
        %576 = vmatprep.subr.bf16.mxu0 0
        %577 = vmatpush2.bf16.msra.mxu0 0
        %578 = vmatprep.subr.bf16.mxu0 0
        %579 = vmatpush2.bf16.msra.mxu0 0
        %580 = vmatprep.subr.bf16.mxu0 0
        %581 = vmatpush2.bf16.msra.mxu0 0
        %582 = vmatprep.subr.bf16.mxu0 0
        %583 = vmatpush2.bf16.msra.mxu0 0
        %584 = vmatprep.mubr.bf16.mxu0 0
        %585 = vmatmul.mubr.bf16.gmra.mxu0 %v541
        %v586 = vpop.f32.mrf.mxu0
        %v587 = vadd.f32 0.0, %v586
        %v588 = vpop.f32.mrf.mxu0
        %v589 = vpop.f32.mrf.mxu0
        %v590 = vadd.f32 0.0, %v589
        %v591 = vpop.f32.mrf.mxu0
        %592 = vmatprep.mubr.bf16.mxu0 0
        %593 = vmatmul.mubr.bf16.gmra.mxu0 %v544
        %v594 = vpop.f32.mrf.mxu0
        %v595 = vadd.f32 0.0, %v594
        %v596 = vpop.f32.mrf.mxu0
        %v597 = vpop.f32.mrf.mxu0
        %v598 = vadd.f32 0.0, %v597
        %v599 = vpop.f32.mrf.mxu0
        %600 = vmatprep.mubr.bf16.mxu0 0
        %601 = vmatmul.mubr.bf16.gmra.mxu0 %v547
        %v602 = vpop.f32.mrf.mxu0
        %v603 = vadd.f32 0.0, %v602
        %v604 = vpop.f32.mrf.mxu0
        %v605 = vpop.f32.mrf.mxu0
        %v606 = vadd.f32 0.0, %v605
        %v607 = vpop.f32.mrf.mxu0
        %608 = vmatprep.mubr.bf16.mxu0 0
        %609 = vmatmul.mubr.bf16.gmra.mxu0 %v550
        %v610 = vpop.f32.mrf.mxu0
        %v611 = vadd.f32 0.0, %v610
        %v612 = vpop.f32.mrf.mxu0
        %v613 = vpop.f32.mrf.mxu0
        %v614 = vadd.f32 0.0, %v613
        %v615 = vpop.f32.mrf.mxu0
        %616 = vdwg.mxu0
        %v617 = vmul.f32 %v587, %v479
        %v618 = vmul.f32 %v590, %v479
        %v619 = vmul.f32 %v595, %v479
        %v620 = vmul.f32 %v598, %v479
        %v621 = vmul.f32 %v603, %v479
        %v622 = vmul.f32 %v606, %v479
        %v623 = vmul.f32 %v611, %v479
        %v624 = vmul.f32 %v614, %v479
        %v625 = vadd.f32 %v617, %v493
        %v626 = vadd.f32 %v618, %v493
        %v627 = vadd.f32 %v619, %v493
        %v628 = vadd.f32 %v620, %v493
        %v629 = vadd.f32 %v621, %v493
        %v630 = vadd.f32 %v622, %v493
        %v631 = vadd.f32 %v623, %v493
        %v632 = vadd.f32 %v624, %v493
        %s633 = scalar_lea.vmem [#allocation2], 192
        %634 = vst [vmem:[%s633 + $0x8] sm:$0xff] %v625
        %635 = vst [vmem:[%s633 + $0x10] sm:$0xff] %v626
        %636 = vst [vmem:[%s633 + $0x28] sm:$0xff] %v627
        %637 = vst [vmem:[%s633 + $0x30] sm:$0xff] %v628
        %638 = vst [vmem:[%s633 + $0x48] sm:$0xff] %v629
        %639 = vst [vmem:[%s633 + $0x50] sm:$0xff] %v630
        %640 = vst [vmem:[%s633 + $0x68] sm:$0xff] %v631
        %641 = vst [vmem:[%s633 + $0x70] sm:$0xff] %v632
        %s642 = scalar_lea.vmem %s292, 64
        %v643 = vld [vmem:[%s642] sm:$0xf]
        %v644 = vld [vmem:[%s642 + $0x4] sm:$0xf]
        %v645 = vld [vmem:[%s642 + $0x8] sm:$0xf]
        %v646 = vld [vmem:[%s642 + $0xc] sm:$0xf]
        %v647 = vld [vmem:[%s642 + $0x10] sm:$0xf]
        %v648 = vld [vmem:[%s642 + $0x14] sm:$0xf]
        %v649 = vld [vmem:[%s642 + $0x18] sm:$0xf]
        %v650 = vld [vmem:[%s642 + $0x1c] sm:$0xf]
        %v659 = vunpack.c.l.b16 %v643
        %v660 = vunpack.c.l.b16 %v644
        %v661 = vunpack.c.l.b16 %v645
        %v662 = vunpack.c.l.b16 %v646
        %v663 = vunpack.c.l.b16 %v647
        %v664 = vunpack.c.l.b16 %v648
        %v665 = vunpack.c.l.b16 %v649
        %v666 = vunpack.c.l.b16 %v650
        %v667 = vpack.c.b16 %v660, %v659
        %v668 = vpack.c.b16 %v662, %v661
        %v669 = vpack.c.b16 %v664, %v663
        %v670 = vpack.c.b16 %v666, %v665
        %v672 = vsel %vm397, %v667, 0
        %v675 = vsel %vm397, %v668, 0
        %v678 = vsel %vm397, %v669, 0
        %v681 = vsel %vm397, %v670, 0
        %683 = vmatprep.subr.bf16.mxu0 0
        %684 = vmatpush1.bf16.msra.mxu0 0
        %685 = vmatprep.subr.bf16.mxu0 0
        %686 = vmatpush1.bf16.msra.mxu0 0
        %687 = vmatprep.subr.bf16.mxu0 0
        %688 = vmatpush1.bf16.msra.mxu0 0
        %689 = vmatprep.subr.bf16.mxu0 0
        %690 = vmatpush1.bf16.msra.mxu0 0
        %691 = vmatprep.subr.bf16.mxu0 0
        %692 = vmatpush1.bf16.msra.mxu0 0
        %693 = vmatprep.subr.bf16.mxu0 0
        %694 = vmatpush1.bf16.msra.mxu0 0
        %695 = vmatprep.subr.bf16.mxu0 0
        %696 = vmatpush1.bf16.msra.mxu0 0
        %697 = vmatprep.subr.bf16.mxu0 0
        %698 = vmatpush1.bf16.msra.mxu0 %v395
        %699 = vmatprep.subr.bf16.mxu0 0
        %700 = vmatpush2.bf16.msra.mxu0 0
        %701 = vmatprep.subr.bf16.mxu0 0
        %702 = vmatpush2.bf16.msra.mxu0 0
        %703 = vmatprep.subr.bf16.mxu0 0
        %704 = vmatpush2.bf16.msra.mxu0 0
        %705 = vmatprep.subr.bf16.mxu0 0
        %706 = vmatpush2.bf16.msra.mxu0 0
        %707 = vmatprep.subr.bf16.mxu0 0
        %708 = vmatpush2.bf16.msra.mxu0 0
        %709 = vmatprep.subr.bf16.mxu0 0
        %710 = vmatpush2.bf16.msra.mxu0 0
        %711 = vmatprep.subr.bf16.mxu0 0
        %712 = vmatpush2.bf16.msra.mxu0 0
        %713 = vmatprep.subr.bf16.mxu0 0
        %714 = vmatpush2.bf16.msra.mxu0 0
        %715 = vmatprep.mubr.bf16.mxu0 0
        %716 = vmatmul.mubr.bf16.gmra.mxu0 %v672
        %v717 = vpop.f32.mrf.mxu0
        %v718 = vadd.f32 0.0, %v717
        %v719 = vpop.f32.mrf.mxu0
        %v720 = vpop.f32.mrf.mxu0
        %v721 = vadd.f32 0.0, %v720
        %v722 = vpop.f32.mrf.mxu0
        %723 = vmatprep.mubr.bf16.mxu0 0
        %724 = vmatmul.mubr.bf16.gmra.mxu0 %v675
        %v725 = vpop.f32.mrf.mxu0
        %v726 = vadd.f32 0.0, %v725
        %v727 = vpop.f32.mrf.mxu0
        %v728 = vpop.f32.mrf.mxu0
        %v729 = vadd.f32 0.0, %v728
        %v730 = vpop.f32.mrf.mxu0
        %731 = vmatprep.mubr.bf16.mxu0 0
        %732 = vmatmul.mubr.bf16.gmra.mxu0 %v678
        %v733 = vpop.f32.mrf.mxu0
        %v734 = vadd.f32 0.0, %v733
        %v735 = vpop.f32.mrf.mxu0
        %v736 = vpop.f32.mrf.mxu0
        %v737 = vadd.f32 0.0, %v736
        %v738 = vpop.f32.mrf.mxu0
        %739 = vmatprep.mubr.bf16.mxu0 0
        %740 = vmatmul.mubr.bf16.gmra.mxu0 %v681
        %v741 = vpop.f32.mrf.mxu0
        %v742 = vadd.f32 0.0, %v741
        %v743 = vpop.f32.mrf.mxu0
        %v744 = vpop.f32.mrf.mxu0
        %v745 = vadd.f32 0.0, %v744
        %v746 = vpop.f32.mrf.mxu0
        %747 = vdwg.mxu0
        %v748 = vmul.f32 %v718, %v479
        %v749 = vmul.f32 %v721, %v479
        %v750 = vmul.f32 %v726, %v479
        %v751 = vmul.f32 %v729, %v479
        %v752 = vmul.f32 %v734, %v479
        %v753 = vmul.f32 %v737, %v479
        %v754 = vmul.f32 %v742, %v479
        %v755 = vmul.f32 %v745, %v479
        %v756 = vadd.f32 %v748, %v493
        %v757 = vadd.f32 %v749, %v493
        %v758 = vadd.f32 %v750, %v493
        %v759 = vadd.f32 %v751, %v493
        %v760 = vadd.f32 %v752, %v493
        %v761 = vadd.f32 %v753, %v493
        %v762 = vadd.f32 %v754, %v493
        %v763 = vadd.f32 %v755, %v493
        %s764 = scalar_lea.vmem [#allocation2], 320
        %765 = vst [vmem:[%s764 + $0x8] sm:$0xff] %v756
        %766 = vst [vmem:[%s764 + $0x10] sm:$0xff] %v757
        %767 = vst [vmem:[%s764 + $0x28] sm:$0xff] %v758
        %768 = vst [vmem:[%s764 + $0x30] sm:$0xff] %v759
        %769 = vst [vmem:[%s764 + $0x48] sm:$0xff] %v760
        %770 = vst [vmem:[%s764 + $0x50] sm:$0xff] %v761
        %771 = vst [vmem:[%s764 + $0x68] sm:$0xff] %v762
        %772 = vst [vmem:[%s764 + $0x70] sm:$0xff] %v763
        %s773 = scalar_lea.vmem %s292, 96
        %v774 = vld [vmem:[%s773] sm:$0xf]
        %v775 = vld [vmem:[%s773 + $0x4] sm:$0xf]
        %v776 = vld [vmem:[%s773 + $0x8] sm:$0xf]
        %v777 = vld [vmem:[%s773 + $0xc] sm:$0xf]
        %v778 = vld [vmem:[%s773 + $0x10] sm:$0xf]
        %v779 = vld [vmem:[%s773 + $0x14] sm:$0xf]
        %v780 = vld [vmem:[%s773 + $0x18] sm:$0xf]
        %v781 = vld [vmem:[%s773 + $0x1c] sm:$0xf]
        %v790 = vunpack.c.l.b16 %v774
        %v791 = vunpack.c.l.b16 %v775
        %v792 = vunpack.c.l.b16 %v776
        %v793 = vunpack.c.l.b16 %v777
        %v794 = vunpack.c.l.b16 %v778
        %v795 = vunpack.c.l.b16 %v779
        %v796 = vunpack.c.l.b16 %v780
        %v797 = vunpack.c.l.b16 %v781
        %v798 = vpack.c.b16 %v791, %v790
        %v799 = vpack.c.b16 %v793, %v792
        %v800 = vpack.c.b16 %v795, %v794
        %v801 = vpack.c.b16 %v797, %v796
        %v803 = vsel %vm397, %v798, 0
        %v806 = vsel %vm397, %v799, 0
        %v809 = vsel %vm397, %v800, 0
        %v812 = vsel %vm397, %v801, 0
        %814 = vmatprep.subr.bf16.mxu0 0
        %815 = vmatpush1.bf16.msra.mxu0 0
        %816 = vmatprep.subr.bf16.mxu0 0
        %817 = vmatpush1.bf16.msra.mxu0 0
        %818 = vmatprep.subr.bf16.mxu0 0
        %819 = vmatpush1.bf16.msra.mxu0 0
        %820 = vmatprep.subr.bf16.mxu0 0
        %821 = vmatpush1.bf16.msra.mxu0 0
        %822 = vmatprep.subr.bf16.mxu0 0
        %823 = vmatpush1.bf16.msra.mxu0 0
        %824 = vmatprep.subr.bf16.mxu0 0
        %825 = vmatpush1.bf16.msra.mxu0 0
        %826 = vmatprep.subr.bf16.mxu0 0
        %827 = vmatpush1.bf16.msra.mxu0 0
        %828 = vmatprep.subr.bf16.mxu0 0
        %829 = vmatpush1.bf16.msra.mxu0 %v395
        %830 = vmatprep.subr.bf16.mxu0 0
        %831 = vmatpush2.bf16.msra.mxu0 0
        %832 = vmatprep.subr.bf16.mxu0 0
        %833 = vmatpush2.bf16.msra.mxu0 0
        %834 = vmatprep.subr.bf16.mxu0 0
        %835 = vmatpush2.bf16.msra.mxu0 0
        %836 = vmatprep.subr.bf16.mxu0 0
        %837 = vmatpush2.bf16.msra.mxu0 0
        %838 = vmatprep.subr.bf16.mxu0 0
        %839 = vmatpush2.bf16.msra.mxu0 0
        %840 = vmatprep.subr.bf16.mxu0 0
        %841 = vmatpush2.bf16.msra.mxu0 0
        %842 = vmatprep.subr.bf16.mxu0 0
        %843 = vmatpush2.bf16.msra.mxu0 0
        %844 = vmatprep.subr.bf16.mxu0 0
        %845 = vmatpush2.bf16.msra.mxu0 0
        %846 = vmatprep.mubr.bf16.mxu0 0
        %847 = vmatmul.mubr.bf16.gmra.mxu0 %v803
        %v848 = vpop.f32.mrf.mxu0
        %v849 = vadd.f32 0.0, %v848
        %v850 = vpop.f32.mrf.mxu0
        %v851 = vpop.f32.mrf.mxu0
        %v852 = vadd.f32 0.0, %v851
        %v853 = vpop.f32.mrf.mxu0
        %854 = vmatprep.mubr.bf16.mxu0 0
        %855 = vmatmul.mubr.bf16.gmra.mxu0 %v806
        %v856 = vpop.f32.mrf.mxu0
        %v857 = vadd.f32 0.0, %v856
        %v858 = vpop.f32.mrf.mxu0
        %v859 = vpop.f32.mrf.mxu0
        %v860 = vadd.f32 0.0, %v859
        %v861 = vpop.f32.mrf.mxu0
        %862 = vmatprep.mubr.bf16.mxu0 0
        %863 = vmatmul.mubr.bf16.gmra.mxu0 %v809
        %v864 = vpop.f32.mrf.mxu0
        %v865 = vadd.f32 0.0, %v864
        %v866 = vpop.f32.mrf.mxu0
        %v867 = vpop.f32.mrf.mxu0
        %v868 = vadd.f32 0.0, %v867
        %v869 = vpop.f32.mrf.mxu0
        %870 = vmatprep.mubr.bf16.mxu0 0
        %871 = vmatmul.mubr.bf16.gmra.mxu0 %v812
        %v872 = vpop.f32.mrf.mxu0
        %v873 = vadd.f32 0.0, %v872
        %v874 = vpop.f32.mrf.mxu0
        %v875 = vpop.f32.mrf.mxu0
        %v876 = vadd.f32 0.0, %v875
        %v877 = vpop.f32.mrf.mxu0
        %878 = vdwg.mxu0
        %v879 = vmul.f32 %v849, %v479
        %v880 = vmul.f32 %v852, %v479
        %v881 = vmul.f32 %v857, %v479
        %v882 = vmul.f32 %v860, %v479
        %v883 = vmul.f32 %v865, %v479
        %v884 = vmul.f32 %v868, %v479
        %v885 = vmul.f32 %v873, %v479
        %v886 = vmul.f32 %v876, %v479
        %v887 = vadd.f32 %v879, %v493
        %v888 = vadd.f32 %v880, %v493
        %v889 = vadd.f32 %v881, %v493
        %v890 = vadd.f32 %v882, %v493
        %v891 = vadd.f32 %v883, %v493
        %v892 = vadd.f32 %v884, %v493
        %v893 = vadd.f32 %v885, %v493
        %v894 = vadd.f32 %v886, %v493
        %s895 = scalar_lea.vmem [#allocation2], 448
        %896 = vst [vmem:[%s895 + $0x8] sm:$0xff] %v887
        %897 = vst [vmem:[%s895 + $0x10] sm:$0xff] %v888
        %898 = vst [vmem:[%s895 + $0x28] sm:$0xff] %v889
        %899 = vst [vmem:[%s895 + $0x30] sm:$0xff] %v890
        %900 = vst [vmem:[%s895 + $0x48] sm:$0xff] %v891
        %901 = vst [vmem:[%s895 + $0x50] sm:$0xff] %v892
        %902 = vst [vmem:[%s895 + $0x68] sm:$0xff] %v893
        %903 = vst [vmem:[%s895 + $0x70] sm:$0xff] %v894
      $region52: #{light_conv_bn_act.1} parent=47 // pred_fallthru
        _
      %s904 = smul.u32 %s23, 4
      %v905 = vld [vmem:[%s4] sm:$0xff]
      %v906 = vld [vmem:[%s4 + $0x8] sm:$0xff]
      %v907 = vld [vmem:[%s4 + $0x10] sm:$0xff]
      %v908 = vld [vmem:[%s4 + $0x18] sm:$0x1]
      %s909 = smul.u32 %s904, 32
      %s910 = scalar_lea.vmem [#allocation2], %s909
      %v911 = vld [vmem:[%s910] sm:$0xff]
      %v912 = vld [vmem:[%s910 + $0x8] sm:$0xff]
      %v913 = vld [vmem:[%s910 + $0x10] sm:$0xff]
      %v914 = vld [vmem:[%s910 + $0x18] sm:$0xff]
      %v915 = vld [vmem:[%s910 + $0x20] sm:$0xff]
      %v916 = vld [vmem:[%s910 + $0x28] sm:$0xff]
      %v917 = vld [vmem:[%s910 + $0x30] sm:$0xff]
      %v918 = vld [vmem:[%s910 + $0x38] sm:$0xff]
      %v919 = vld [vmem:[%s910 + $0x40] sm:$0xff]
      %v920 = vld [vmem:[%s910 + $0x48] sm:$0xff]
      %v921 = vld [vmem:[%s910 + $0x50] sm:$0xff]
      %v922 = vld [vmem:[%s910 + $0x58] sm:$0xff]
      %v923 = vld [vmem:[%s910 + $0x60] sm:$0xff]
      %v924 = vld [vmem:[%s910 + $0x68] sm:$0xff]
      %v925 = vld [vmem:[%s910 + $0x70] sm:$0xff]
      %v926 = vld [vmem:[%s910 + $0x78] sm:$0xff]
      %v927 = vrot.slane %v911, 6
      %v928 = vrot.slane %v915, 6
      %v929 = vrot.slane %v919, 6
      %v930 = vrot.slane %v923, 6
      %v931 = vrot.slane %v912, 6
      %v932 = vrot.slane %v916, 6
      %v933 = vrot.slane %v920, 6
      %v934 = vrot.slane %v924, 6
      %v935 = vrot.slane %v913, 6
      %v936 = vrot.slane %v917, 6
      %v937 = vrot.slane %v921, 6
      %v938 = vrot.slane %v925, 6
      %v939 = vlaneseq
      %v940 = vshrl.u32 %v939, 7
      %vm941 = vcmp.lt.s32.totalorder %v940, 2
      %v942 = vsel %vm941, %v931, %v935
      %v943 = vsel %vm941, %v932, %v936
      %v944 = vsel %vm941, %v933, %v937
      %v945 = vsel %vm941, %v934, %v938
      %v946 = vsel %vm941, %v927, %v931
      %v947 = vsel %vm941, %v928, %v932
      %v948 = vsel %vm941, %v929, %v933
      %v949 = vsel %vm941, %v930, %v934
      %v950 = vlaneseq
      %v951 = vshrl.u32 %v950, 7
      %v952 = vsub.s32 0, %v951
      %v953 = vrot.slane %v905, %v952
      %v954 = vmul.f32 %v946, %v953
      %v955 = vmul.f32 %v942, %v953
      %v956 = vmul.f32 %v947, %v953
      %v957 = vmul.f32 %v943, %v953
      %v958 = vmul.f32 %v948, %v953
      %v959 = vmul.f32 %v944, %v953
      %v960 = vmul.f32 %v949, %v953
      %v961 = vmul.f32 %v945, %v953
      %v962 = vadd.f32 %v954, 0.0
      %v963 = vadd.f32 %v955, 0.0
      %v964 = vadd.f32 %v956, 0.0
      %v965 = vadd.f32 %v957, 0.0
      %v966 = vadd.f32 %v958, 0.0
      %v967 = vadd.f32 %v959, 0.0
      %v968 = vadd.f32 %v960, 0.0
      %v969 = vadd.f32 %v961, 0.0
      %v970 = vrot.slane %v911, 7
      %v971 = vrot.slane %v915, 7
      %v972 = vrot.slane %v919, 7
      %v973 = vrot.slane %v923, 7
      %v974 = vrot.slane %v912, 7
      %v975 = vrot.slane %v916, 7
      %v976 = vrot.slane %v920, 7
      %v977 = vrot.slane %v924, 7
      %v978 = vrot.slane %v913, 7
      %v979 = vrot.slane %v917, 7
      %v980 = vrot.slane %v921, 7
      %v981 = vrot.slane %v925, 7
      %vm982 = vcmp.lt.s32.totalorder %v940, 1
      %v983 = vsel %vm982, %v974, %v978
      %v984 = vsel %vm982, %v975, %v979
      %v985 = vsel %vm982, %v976, %v980
      %v986 = vsel %vm982, %v977, %v981
      %v987 = vsel %vm982, %v970, %v974
      %v988 = vsel %vm982, %v971, %v975
      %v989 = vsel %vm982, %v972, %v976
      %v990 = vsel %vm982, %v973, %v977
      %v991 = vlaneseq
      %v992 = vshrl.u32 %v991, 7
      %v993 = vsub.s32 1, %v992
      %v994 = vrot.slane %v905, %v993
      %v995 = vmul.f32 %v987, %v994
      %v996 = vmul.f32 %v983, %v994
      %v997 = vmul.f32 %v988, %v994
      %v998 = vmul.f32 %v984, %v994
      %v999 = vmul.f32 %v989, %v994
      %v1000 = vmul.f32 %v985, %v994
      %v1001 = vmul.f32 %v990, %v994
      %v1002 = vmul.f32 %v986, %v994
      %v1003 = vadd.f32 %v962, %v995
      %v1004 = vadd.f32 %v963, %v996
      %v1005 = vadd.f32 %v964, %v997
      %v1006 = vadd.f32 %v965, %v998
      %v1007 = vadd.f32 %v966, %v999
      %v1008 = vadd.f32 %v967, %v1000
      %v1009 = vadd.f32 %v968, %v1001
      %v1010 = vadd.f32 %v969, %v1002
      %v1011 = vlaneseq
      %v1012 = vshrl.u32 %v1011, 7
      %v1013 = vsub.s32 2, %v1012
      %v1014 = vrot.slane %v905, %v1013
      %v1015 = vmul.f32 %v912, %v1014
      %v1016 = vmul.f32 %v913, %v1014
      %v1017 = vmul.f32 %v916, %v1014
      %v1018 = vmul.f32 %v917, %v1014
      %v1019 = vmul.f32 %v920, %v1014
      %v1020 = vmul.f32 %v921, %v1014
      %v1021 = vmul.f32 %v924, %v1014
      %v1022 = vmul.f32 %v925, %v1014
      %v1023 = vadd.f32 %v1003, %v1015
      %v1024 = vadd.f32 %v1004, %v1016
      %v1025 = vadd.f32 %v1005, %v1017
      %v1026 = vadd.f32 %v1006, %v1018
      %v1027 = vadd.f32 %v1007, %v1019
      %v1028 = vadd.f32 %v1008, %v1020
      %v1029 = vadd.f32 %v1009, %v1021
      %v1030 = vadd.f32 %v1010, %v1022
      %v1031 = vrot.slane %v912, 1
      %v1032 = vrot.slane %v916, 1
      %v1033 = vrot.slane %v920, 1
      %v1034 = vrot.slane %v924, 1
      %v1035 = vrot.slane %v913, 1
      %v1036 = vrot.slane %v917, 1
      %v1037 = vrot.slane %v921, 1
      %v1038 = vrot.slane %v925, 1
      %v1039 = vrot.slane %v914, 1
      %v1040 = vrot.slane %v918, 1
      %v1041 = vrot.slane %v922, 1
      %v1042 = vrot.slane %v926, 1
      %vm1043 = vcmp.lt.s32.totalorder %v940, 7
      %v1044 = vsel %vm1043, %v1035, %v1039
      %v1045 = vsel %vm1043, %v1036, %v1040
      %v1046 = vsel %vm1043, %v1037, %v1041
      %v1047 = vsel %vm1043, %v1038, %v1042
      %v1048 = vsel %vm1043, %v1031, %v1035
      %v1049 = vsel %vm1043, %v1032, %v1036
      %v1050 = vsel %vm1043, %v1033, %v1037
      %v1051 = vsel %vm1043, %v1034, %v1038
      %v1052 = vlaneseq
      %v1053 = vshrl.u32 %v1052, 7
      %v1054 = vsub.s32 3, %v1053
      %v1055 = vrot.slane %v905, %v1054
      %v1056 = vmul.f32 %v1048, %v1055
      %v1057 = vmul.f32 %v1044, %v1055
      %v1058 = vmul.f32 %v1049, %v1055
      %v1059 = vmul.f32 %v1045, %v1055
      %v1060 = vmul.f32 %v1050, %v1055
      %v1061 = vmul.f32 %v1046, %v1055
      %v1062 = vmul.f32 %v1051, %v1055
      %v1063 = vmul.f32 %v1047, %v1055
      %v1064 = vadd.f32 %v1023, %v1056
      %v1065 = vadd.f32 %v1024, %v1057
      %v1066 = vadd.f32 %v1025, %v1058
      %v1067 = vadd.f32 %v1026, %v1059
      %v1068 = vadd.f32 %v1027, %v1060
      %v1069 = vadd.f32 %v1028, %v1061
      %v1070 = vadd.f32 %v1029, %v1062
      %v1071 = vadd.f32 %v1030, %v1063
      %v1072 = vrot.slane %v912, 2
      %v1073 = vrot.slane %v916, 2
      %v1074 = vrot.slane %v920, 2
      %v1075 = vrot.slane %v924, 2
      %v1076 = vrot.slane %v913, 2
      %v1077 = vrot.slane %v917, 2
      %v1078 = vrot.slane %v921, 2
      %v1079 = vrot.slane %v925, 2
      %v1080 = vrot.slane %v914, 2
      %v1081 = vrot.slane %v918, 2
      %v1082 = vrot.slane %v922, 2
      %v1083 = vrot.slane %v926, 2
      %vm1084 = vcmp.lt.s32.totalorder %v940, 6
      %v1085 = vsel %vm1084, %v1076, %v1080
      %v1086 = vsel %vm1084, %v1077, %v1081
      %v1087 = vsel %vm1084, %v1078, %v1082
      %v1088 = vsel %vm1084, %v1079, %v1083
      %v1089 = vsel %vm1084, %v1072, %v1076
      %v1090 = vsel %vm1084, %v1073, %v1077
      %v1091 = vsel %vm1084, %v1074, %v1078
      %v1092 = vsel %vm1084, %v1075, %v1079
      %v1093 = vlaneseq
      %v1094 = vshrl.u32 %v1093, 7
      %v1095 = vsub.s32 4, %v1094
      %v1096 = vrot.slane %v905, %v1095
      %v1097 = vmul.f32 %v1089, %v1096
      %v1098 = vmul.f32 %v1085, %v1096
      %v1099 = vmul.f32 %v1090, %v1096
      %v1100 = vmul.f32 %v1086, %v1096
      %v1101 = vmul.f32 %v1091, %v1096
      %v1102 = vmul.f32 %v1087, %v1096
      %v1103 = vmul.f32 %v1092, %v1096
      %v1104 = vmul.f32 %v1088, %v1096
      %v1105 = vadd.f32 %v1064, %v1097
      %v1106 = vadd.f32 %v1065, %v1098
      %v1107 = vadd.f32 %v1066, %v1099
      %v1108 = vadd.f32 %v1067, %v1100
      %v1109 = vadd.f32 %v1068, %v1101
      %v1110 = vadd.f32 %v1069, %v1102
      %v1111 = vadd.f32 %v1070, %v1103
      %v1112 = vadd.f32 %v1071, %v1104
      %s1113 = sadd.s32 %s904, 1
      %s1114 = smul.u32 %s1113, 32
      %s1115 = scalar_lea.vmem [#allocation2], %s1114
      %v1116 = vld [vmem:[%s1115] sm:$0xff]
      %v1117 = vld [vmem:[%s1115 + $0x8] sm:$0xff]
      %v1118 = vld [vmem:[%s1115 + $0x10] sm:$0xff]
      %v1119 = vld [vmem:[%s1115 + $0x18] sm:$0xff]
      %v1120 = vld [vmem:[%s1115 + $0x20] sm:$0xff]
      %v1121 = vld [vmem:[%s1115 + $0x28] sm:$0xff]
      %v1122 = vld [vmem:[%s1115 + $0x30] sm:$0xff]
      %v1123 = vld [vmem:[%s1115 + $0x38] sm:$0xff]
      %v1124 = vld [vmem:[%s1115 + $0x40] sm:$0xff]
      %v1125 = vld [vmem:[%s1115 + $0x48] sm:$0xff]
      %v1126 = vld [vmem:[%s1115 + $0x50] sm:$0xff]
      %v1127 = vld [vmem:[%s1115 + $0x58] sm:$0xff]
      %v1128 = vld [vmem:[%s1115 + $0x60] sm:$0xff]
      %v1129 = vld [vmem:[%s1115 + $0x68] sm:$0xff]
      %v1130 = vld [vmem:[%s1115 + $0x70] sm:$0xff]
      %v1131 = vld [vmem:[%s1115 + $0x78] sm:$0xff]
      %v1132 = vrot.slane %v1116, 6
      %v1133 = vrot.slane %v1120, 6
      %v1134 = vrot.slane %v1124, 6
      %v1135 = vrot.slane %v1128, 6
      %v1136 = vrot.slane %v1117, 6
      %v1137 = vrot.slane %v1121, 6
      %v1138 = vrot.slane %v1125, 6
      %v1139 = vrot.slane %v1129, 6
      %v1140 = vrot.slane %v1118, 6
      %v1141 = vrot.slane %v1122, 6
      %v1142 = vrot.slane %v1126, 6
      %v1143 = vrot.slane %v1130, 6
      %v1144 = vsel %vm941, %v1136, %v1140
      %v1145 = vsel %vm941, %v1137, %v1141
      %v1146 = vsel %vm941, %v1138, %v1142
      %v1147 = vsel %vm941, %v1139, %v1143
      %v1148 = vsel %vm941, %v1132, %v1136
      %v1149 = vsel %vm941, %v1133, %v1137
      %v1150 = vsel %vm941, %v1134, %v1138
      %v1151 = vsel %vm941, %v1135, %v1139
      %v1152 = vlaneseq
      %v1153 = vshrl.u32 %v1152, 7
      %v1154 = vsub.s32 5, %v1153
      %v1155 = vrot.slane %v905, %v1154
      %v1156 = vmul.f32 %v1148, %v1155
      %v1157 = vmul.f32 %v1144, %v1155
      %v1158 = vmul.f32 %v1149, %v1155
      %v1159 = vmul.f32 %v1145, %v1155
      %v1160 = vmul.f32 %v1150, %v1155
      %v1161 = vmul.f32 %v1146, %v1155
      %v1162 = vmul.f32 %v1151, %v1155
      %v1163 = vmul.f32 %v1147, %v1155
      %v1164 = vadd.f32 %v1105, %v1156
      %v1165 = vadd.f32 %v1106, %v1157
      %v1166 = vadd.f32 %v1107, %v1158
      %v1167 = vadd.f32 %v1108, %v1159
      %v1168 = vadd.f32 %v1109, %v1160
      %v1169 = vadd.f32 %v1110, %v1161
      %v1170 = vadd.f32 %v1111, %v1162
      %v1171 = vadd.f32 %v1112, %v1163
      %v1172 = vrot.slane %v1116, 7
      %v1173 = vrot.slane %v1120, 7
      %v1174 = vrot.slane %v1124, 7
      %v1175 = vrot.slane %v1128, 7
      %v1176 = vrot.slane %v1117, 7
      %v1177 = vrot.slane %v1121, 7
      %v1178 = vrot.slane %v1125, 7
      %v1179 = vrot.slane %v1129, 7
      %v1180 = vrot.slane %v1118, 7
      %v1181 = vrot.slane %v1122, 7
      %v1182 = vrot.slane %v1126, 7
      %v1183 = vrot.slane %v1130, 7
      %v1184 = vsel %vm982, %v1176, %v1180
      %v1185 = vsel %vm982, %v1177, %v1181
      %v1186 = vsel %vm982, %v1178, %v1182
      %v1187 = vsel %vm982, %v1179, %v1183
      %v1188 = vsel %vm982, %v1172, %v1176
      %v1189 = vsel %vm982, %v1173, %v1177
      %v1190 = vsel %vm982, %v1174, %v1178
      %v1191 = vsel %vm982, %v1175, %v1179
      %v1192 = vlaneseq
      %v1193 = vshrl.u32 %v1192, 7
      %v1194 = vsub.s32 6, %v1193
      %v1195 = vrot.slane %v905, %v1194
      %v1196 = vmul.f32 %v1188, %v1195
      %v1197 = vmul.f32 %v1184, %v1195
      %v1198 = vmul.f32 %v1189, %v1195
      %v1199 = vmul.f32 %v1185, %v1195
      %v1200 = vmul.f32 %v1190, %v1195
      %v1201 = vmul.f32 %v1186, %v1195
      %v1202 = vmul.f32 %v1191, %v1195
      %v1203 = vmul.f32 %v1187, %v1195
      %v1204 = vadd.f32 %v1164, %v1196
      %v1205 = vadd.f32 %v1165, %v1197
      %v1206 = vadd.f32 %v1166, %v1198
      %v1207 = vadd.f32 %v1167, %v1199
      %v1208 = vadd.f32 %v1168, %v1200
      %v1209 = vadd.f32 %v1169, %v1201
      %v1210 = vadd.f32 %v1170, %v1202
      %v1211 = vadd.f32 %v1171, %v1203
      %v1212 = vlaneseq
      %v1213 = vshrl.u32 %v1212, 7
      %v1214 = vsub.s32 7, %v1213
      %v1215 = vrot.slane %v905, %v1214
      %v1216 = vmul.f32 %v1117, %v1215
      %v1217 = vmul.f32 %v1118, %v1215
      %v1218 = vmul.f32 %v1121, %v1215
      %v1219 = vmul.f32 %v1122, %v1215
      %v1220 = vmul.f32 %v1125, %v1215
      %v1221 = vmul.f32 %v1126, %v1215
      %v1222 = vmul.f32 %v1129, %v1215
      %v1223 = vmul.f32 %v1130, %v1215
      %v1224 = vadd.f32 %v1204, %v1216
      %v1225 = vadd.f32 %v1205, %v1217
      %v1226 = vadd.f32 %v1206, %v1218
      %v1227 = vadd.f32 %v1207, %v1219
      %v1228 = vadd.f32 %v1208, %v1220
      %v1229 = vadd.f32 %v1209, %v1221
      %v1230 = vadd.f32 %v1210, %v1222
      %v1231 = vadd.f32 %v1211, %v1223
      %v1232 = vrot.slane %v1117, 1
      %v1233 = vrot.slane %v1121, 1
      %v1234 = vrot.slane %v1125, 1
      %v1235 = vrot.slane %v1129, 1
      %v1236 = vrot.slane %v1118, 1
      %v1237 = vrot.slane %v1122, 1
      %v1238 = vrot.slane %v1126, 1
      %v1239 = vrot.slane %v1130, 1
      %v1240 = vrot.slane %v1119, 1
      %v1241 = vrot.slane %v1123, 1
      %v1242 = vrot.slane %v1127, 1
      %v1243 = vrot.slane %v1131, 1
      %v1244 = vsel %vm1043, %v1236, %v1240
      %v1245 = vsel %vm1043, %v1237, %v1241
      %v1246 = vsel %vm1043, %v1238, %v1242
      %v1247 = vsel %vm1043, %v1239, %v1243
      %v1248 = vsel %vm1043, %v1232, %v1236
      %v1249 = vsel %vm1043, %v1233, %v1237
      %v1250 = vsel %vm1043, %v1234, %v1238
      %v1251 = vsel %vm1043, %v1235, %v1239
      %v1252 = vlaneseq
      %v1253 = vshrl.u32 %v1252, 7
      %v1254 = vsub.s32 0, %v1253
      %v1255 = vrot.slane %v906, %v1254
      %v1256 = vmul.f32 %v1248, %v1255
      %v1257 = vmul.f32 %v1244, %v1255
      %v1258 = vmul.f32 %v1249, %v1255
      %v1259 = vmul.f32 %v1245, %v1255
      %v1260 = vmul.f32 %v1250, %v1255
      %v1261 = vmul.f32 %v1246, %v1255
      %v1262 = vmul.f32 %v1251, %v1255
      %v1263 = vmul.f32 %v1247, %v1255
      %v1264 = vadd.f32 %v1224, %v1256
      %v1265 = vadd.f32 %v1225, %v1257
      %v1266 = vadd.f32 %v1226, %v1258
      %v1267 = vadd.f32 %v1227, %v1259
      %v1268 = vadd.f32 %v1228, %v1260
      %v1269 = vadd.f32 %v1229, %v1261
      %v1270 = vadd.f32 %v1230, %v1262
      %v1271 = vadd.f32 %v1231, %v1263
      %v1272 = vrot.slane %v1117, 2
      %v1273 = vrot.slane %v1121, 2
      %v1274 = vrot.slane %v1125, 2
      %v1275 = vrot.slane %v1129, 2
      %v1276 = vrot.slane %v1118, 2
      %v1277 = vrot.slane %v1122, 2
      %v1278 = vrot.slane %v1126, 2
      %v1279 = vrot.slane %v1130, 2
      %v1280 = vrot.slane %v1119, 2
      %v1281 = vrot.slane %v1123, 2
      %v1282 = vrot.slane %v1127, 2
      %v1283 = vrot.slane %v1131, 2
      %v1284 = vsel %vm1084, %v1276, %v1280
      %v1285 = vsel %vm1084, %v1277, %v1281
      %v1286 = vsel %vm1084, %v1278, %v1282
      %v1287 = vsel %vm1084, %v1279, %v1283
      %v1288 = vsel %vm1084, %v1272, %v1276
      %v1289 = vsel %vm1084, %v1273, %v1277
      %v1290 = vsel %vm1084, %v1274, %v1278
      %v1291 = vsel %vm1084, %v1275, %v1279
      %v1292 = vlaneseq
      %v1293 = vshrl.u32 %v1292, 7
      %v1294 = vsub.s32 1, %v1293
      %v1295 = vrot.slane %v906, %v1294
      %v1296 = vmul.f32 %v1288, %v1295
      %v1297 = vmul.f32 %v1284, %v1295
      %v1298 = vmul.f32 %v1289, %v1295
      %v1299 = vmul.f32 %v1285, %v1295
      %v1300 = vmul.f32 %v1290, %v1295
      %v1301 = vmul.f32 %v1286, %v1295
      %v1302 = vmul.f32 %v1291, %v1295
      %v1303 = vmul.f32 %v1287, %v1295
      %v1304 = vadd.f32 %v1264, %v1296
      %v1305 = vadd.f32 %v1265, %v1297
      %v1306 = vadd.f32 %v1266, %v1298
      %v1307 = vadd.f32 %v1267, %v1299
      %v1308 = vadd.f32 %v1268, %v1300
      %v1309 = vadd.f32 %v1269, %v1301
      %v1310 = vadd.f32 %v1270, %v1302
      %v1311 = vadd.f32 %v1271, %v1303
      %s1312 = sadd.s32 %s904, 2
      %s1313 = smul.u32 %s1312, 32
      %s1314 = scalar_lea.vmem [#allocation2], %s1313
      %v1315 = vld [vmem:[%s1314] sm:$0xff]
      %v1316 = vld [vmem:[%s1314 + $0x8] sm:$0xff]
      %v1317 = vld [vmem:[%s1314 + $0x10] sm:$0xff]
      %v1318 = vld [vmem:[%s1314 + $0x18] sm:$0xff]
      %v1319 = vld [vmem:[%s1314 + $0x20] sm:$0xff]
      %v1320 = vld [vmem:[%s1314 + $0x28] sm:$0xff]
      %v1321 = vld [vmem:[%s1314 + $0x30] sm:$0xff]
      %v1322 = vld [vmem:[%s1314 + $0x38] sm:$0xff]
      %v1323 = vld [vmem:[%s1314 + $0x40] sm:$0xff]
      %v1324 = vld [vmem:[%s1314 + $0x48] sm:$0xff]
      %v1325 = vld [vmem:[%s1314 + $0x50] sm:$0xff]
      %v1326 = vld [vmem:[%s1314 + $0x58] sm:$0xff]
      %v1327 = vld [vmem:[%s1314 + $0x60] sm:$0xff]
      %v1328 = vld [vmem:[%s1314 + $0x68] sm:$0xff]
      %v1329 = vld [vmem:[%s1314 + $0x70] sm:$0xff]
      %v1330 = vld [vmem:[%s1314 + $0x78] sm:$0xff]
      %v1331 = vrot.slane %v1315, 6
      %v1332 = vrot.slane %v1319, 6
      %v1333 = vrot.slane %v1323, 6
      %v1334 = vrot.slane %v1327, 6
      %v1335 = vrot.slane %v1316, 6
      %v1336 = vrot.slane %v1320, 6
      %v1337 = vrot.slane %v1324, 6
      %v1338 = vrot.slane %v1328, 6
      %v1339 = vrot.slane %v1317, 6
      %v1340 = vrot.slane %v1321, 6
      %v1341 = vrot.slane %v1325, 6
      %v1342 = vrot.slane %v1329, 6
      %v1343 = vsel %vm941, %v1335, %v1339
      %v1344 = vsel %vm941, %v1336, %v1340
      %v1345 = vsel %vm941, %v1337, %v1341
      %v1346 = vsel %vm941, %v1338, %v1342
      %v1347 = vsel %vm941, %v1331, %v1335
      %v1348 = vsel %vm941, %v1332, %v1336
      %v1349 = vsel %vm941, %v1333, %v1337
      %v1350 = vsel %vm941, %v1334, %v1338
      %v1351 = vlaneseq
      %v1352 = vshrl.u32 %v1351, 7
      %v1353 = vsub.s32 2, %v1352
      %v1354 = vrot.slane %v906, %v1353
      %v1355 = vmul.f32 %v1347, %v1354
      %v1356 = vmul.f32 %v1343, %v1354
      %v1357 = vmul.f32 %v1348, %v1354
      %v1358 = vmul.f32 %v1344, %v1354
      %v1359 = vmul.f32 %v1349, %v1354
      %v1360 = vmul.f32 %v1345, %v1354
      %v1361 = vmul.f32 %v1350, %v1354
      %v1362 = vmul.f32 %v1346, %v1354
      %v1363 = vadd.f32 %v1304, %v1355
      %v1364 = vadd.f32 %v1305, %v1356
      %v1365 = vadd.f32 %v1306, %v1357
      %v1366 = vadd.f32 %v1307, %v1358
      %v1367 = vadd.f32 %v1308, %v1359
      %v1368 = vadd.f32 %v1309, %v1360
      %v1369 = vadd.f32 %v1310, %v1361
      %v1370 = vadd.f32 %v1311, %v1362
      %v1371 = vrot.slane %v1315, 7
      %v1372 = vrot.slane %v1319, 7
      %v1373 = vrot.slane %v1323, 7
      %v1374 = vrot.slane %v1327, 7
      %v1375 = vrot.slane %v1316, 7
      %v1376 = vrot.slane %v1320, 7
      %v1377 = vrot.slane %v1324, 7
      %v1378 = vrot.slane %v1328, 7
      %v1379 = vrot.slane %v1317, 7
      %v1380 = vrot.slane %v1321, 7
      %v1381 = vrot.slane %v1325, 7
      %v1382 = vrot.slane %v1329, 7
      %v1383 = vsel %vm982, %v1375, %v1379
      %v1384 = vsel %vm982, %v1376, %v1380
      %v1385 = vsel %vm982, %v1377, %v1381
      %v1386 = vsel %vm982, %v1378, %v1382
      %v1387 = vsel %vm982, %v1371, %v1375
      %v1388 = vsel %vm982, %v1372, %v1376
      %v1389 = vsel %vm982, %v1373, %v1377
      %v1390 = vsel %vm982, %v1374, %v1378
      %v1391 = vlaneseq
      %v1392 = vshrl.u32 %v1391, 7
      %v1393 = vsub.s32 3, %v1392
      %v1394 = vrot.slane %v906, %v1393
      %v1395 = vmul.f32 %v1387, %v1394
      %v1396 = vmul.f32 %v1383, %v1394
      %v1397 = vmul.f32 %v1388, %v1394
      %v1398 = vmul.f32 %v1384, %v1394
      %v1399 = vmul.f32 %v1389, %v1394
      %v1400 = vmul.f32 %v1385, %v1394
      %v1401 = vmul.f32 %v1390, %v1394
      %v1402 = vmul.f32 %v1386, %v1394
      %v1403 = vadd.f32 %v1363, %v1395
      %v1404 = vadd.f32 %v1364, %v1396
      %v1405 = vadd.f32 %v1365, %v1397
      %v1406 = vadd.f32 %v1366, %v1398
      %v1407 = vadd.f32 %v1367, %v1399
      %v1408 = vadd.f32 %v1368, %v1400
      %v1409 = vadd.f32 %v1369, %v1401
      %v1410 = vadd.f32 %v1370, %v1402
      %v1411 = vlaneseq
      %v1412 = vshrl.u32 %v1411, 7
      %v1413 = vsub.s32 4, %v1412
      %v1414 = vrot.slane %v906, %v1413
      %v1415 = vmul.f32 %v1316, %v1414
      %v1416 = vmul.f32 %v1317, %v1414
      %v1417 = vmul.f32 %v1320, %v1414
      %v1418 = vmul.f32 %v1321, %v1414
      %v1419 = vmul.f32 %v1324, %v1414
      %v1420 = vmul.f32 %v1325, %v1414
      %v1421 = vmul.f32 %v1328, %v1414
      %v1422 = vmul.f32 %v1329, %v1414
      %v1423 = vadd.f32 %v1403, %v1415
      %v1424 = vadd.f32 %v1404, %v1416
      %v1425 = vadd.f32 %v1405, %v1417
      %v1426 = vadd.f32 %v1406, %v1418
      %v1427 = vadd.f32 %v1407, %v1419
      %v1428 = vadd.f32 %v1408, %v1420
      %v1429 = vadd.f32 %v1409, %v1421
      %v1430 = vadd.f32 %v1410, %v1422
      %v1431 = vrot.slane %v1316, 1
      %v1432 = vrot.slane %v1320, 1
      %v1433 = vrot.slane %v1324, 1
      %v1434 = vrot.slane %v1328, 1
      %v1435 = vrot.slane %v1317, 1
      %v1436 = vrot.slane %v1321, 1
      %v1437 = vrot.slane %v1325, 1
      %v1438 = vrot.slane %v1329, 1
      %v1439 = vrot.slane %v1318, 1
      %v1440 = vrot.slane %v1322, 1
      %v1441 = vrot.slane %v1326, 1
      %v1442 = vrot.slane %v1330, 1
      %v1443 = vsel %vm1043, %v1435, %v1439
      %v1444 = vsel %vm1043, %v1436, %v1440
      %v1445 = vsel %vm1043, %v1437, %v1441
      %v1446 = vsel %vm1043, %v1438, %v1442
      %v1447 = vsel %vm1043, %v1431, %v1435
      %v1448 = vsel %vm1043, %v1432, %v1436
      %v1449 = vsel %vm1043, %v1433, %v1437
      %v1450 = vsel %vm1043, %v1434, %v1438
      %v1451 = vlaneseq
      %v1452 = vshrl.u32 %v1451, 7
      %v1453 = vsub.s32 5, %v1452
      %v1454 = vrot.slane %v906, %v1453
      %v1455 = vmul.f32 %v1447, %v1454
      %v1456 = vmul.f32 %v1443, %v1454
      %v1457 = vmul.f32 %v1448, %v1454
      %v1458 = vmul.f32 %v1444, %v1454
      %v1459 = vmul.f32 %v1449, %v1454
      %v1460 = vmul.f32 %v1445, %v1454
      %v1461 = vmul.f32 %v1450, %v1454
      %v1462 = vmul.f32 %v1446, %v1454
      %v1463 = vadd.f32 %v1423, %v1455
      %v1464 = vadd.f32 %v1424, %v1456
      %v1465 = vadd.f32 %v1425, %v1457
      %v1466 = vadd.f32 %v1426, %v1458
      %v1467 = vadd.f32 %v1427, %v1459
      %v1468 = vadd.f32 %v1428, %v1460
      %v1469 = vadd.f32 %v1429, %v1461
      %v1470 = vadd.f32 %v1430, %v1462
      %v1471 = vrot.slane %v1316, 2
      %v1472 = vrot.slane %v1320, 2
      %v1473 = vrot.slane %v1324, 2
      %v1474 = vrot.slane %v1328, 2
      %v1475 = vrot.slane %v1317, 2
      %v1476 = vrot.slane %v1321, 2
      %v1477 = vrot.slane %v1325, 2
      %v1478 = vrot.slane %v1329, 2
      %v1479 = vrot.slane %v1318, 2
      %v1480 = vrot.slane %v1322, 2
      %v1481 = vrot.slane %v1326, 2
      %v1482 = vrot.slane %v1330, 2
      %v1483 = vsel %vm1084, %v1475, %v1479
      %v1484 = vsel %vm1084, %v1476, %v1480
      %v1485 = vsel %vm1084, %v1477, %v1481
      %v1486 = vsel %vm1084, %v1478, %v1482
      %v1487 = vsel %vm1084, %v1471, %v1475
      %v1488 = vsel %vm1084, %v1472, %v1476
      %v1489 = vsel %vm1084, %v1473, %v1477
      %v1490 = vsel %vm1084, %v1474, %v1478
      %v1491 = vlaneseq
      %v1492 = vshrl.u32 %v1491, 7
      %v1493 = vsub.s32 6, %v1492
      %v1494 = vrot.slane %v906, %v1493
      %v1495 = vmul.f32 %v1487, %v1494
      %v1496 = vmul.f32 %v1483, %v1494
      %v1497 = vmul.f32 %v1488, %v1494
      %v1498 = vmul.f32 %v1484, %v1494
      %v1499 = vmul.f32 %v1489, %v1494
      %v1500 = vmul.f32 %v1485, %v1494
      %v1501 = vmul.f32 %v1490, %v1494
      %v1502 = vmul.f32 %v1486, %v1494
      %v1503 = vadd.f32 %v1463, %v1495
      %v1504 = vadd.f32 %v1464, %v1496
      %v1505 = vadd.f32 %v1465, %v1497
      %v1506 = vadd.f32 %v1466, %v1498
      %v1507 = vadd.f32 %v1467, %v1499
      %v1508 = vadd.f32 %v1468, %v1500
      %v1509 = vadd.f32 %v1469, %v1501
      %v1510 = vadd.f32 %v1470, %v1502
      %s1511 = sadd.s32 %s904, 3
      %s1512 = smul.u32 %s1511, 32
      %s1513 = scalar_lea.vmem [#allocation2], %s1512
      %v1514 = vld [vmem:[%s1513] sm:$0xff]
      %v1515 = vld [vmem:[%s1513 + $0x8] sm:$0xff]
      %v1516 = vld [vmem:[%s1513 + $0x10] sm:$0xff]
      %v1517 = vld [vmem:[%s1513 + $0x18] sm:$0xff]
      %v1518 = vld [vmem:[%s1513 + $0x20] sm:$0xff]
      %v1519 = vld [vmem:[%s1513 + $0x28] sm:$0xff]
      %v1520 = vld [vmem:[%s1513 + $0x30] sm:$0xff]
      %v1521 = vld [vmem:[%s1513 + $0x38] sm:$0xff]
      %v1522 = vld [vmem:[%s1513 + $0x40] sm:$0xff]
      %v1523 = vld [vmem:[%s1513 + $0x48] sm:$0xff]
      %v1524 = vld [vmem:[%s1513 + $0x50] sm:$0xff]
      %v1525 = vld [vmem:[%s1513 + $0x58] sm:$0xff]
      %v1526 = vld [vmem:[%s1513 + $0x60] sm:$0xff]
      %v1527 = vld [vmem:[%s1513 + $0x68] sm:$0xff]
      %v1528 = vld [vmem:[%s1513 + $0x70] sm:$0xff]
      %v1529 = vld [vmem:[%s1513 + $0x78] sm:$0xff]
      %v1530 = vrot.slane %v1514, 6
      %v1531 = vrot.slane %v1518, 6
      %v1532 = vrot.slane %v1522, 6
      %v1533 = vrot.slane %v1526, 6
      %v1534 = vrot.slane %v1515, 6
      %v1535 = vrot.slane %v1519, 6
      %v1536 = vrot.slane %v1523, 6
      %v1537 = vrot.slane %v1527, 6
      %v1538 = vrot.slane %v1516, 6
      %v1539 = vrot.slane %v1520, 6
      %v1540 = vrot.slane %v1524, 6
      %v1541 = vrot.slane %v1528, 6
      %v1542 = vsel %vm941, %v1534, %v1538
      %v1543 = vsel %vm941, %v1535, %v1539
      %v1544 = vsel %vm941, %v1536, %v1540
      %v1545 = vsel %vm941, %v1537, %v1541
      %v1546 = vsel %vm941, %v1530, %v1534
      %v1547 = vsel %vm941, %v1531, %v1535
      %v1548 = vsel %vm941, %v1532, %v1536
      %v1549 = vsel %vm941, %v1533, %v1537
      %v1550 = vlaneseq
      %v1551 = vshrl.u32 %v1550, 7
      %v1552 = vsub.s32 7, %v1551
      %v1553 = vrot.slane %v906, %v1552
      %v1554 = vmul.f32 %v1546, %v1553
      %v1555 = vmul.f32 %v1542, %v1553
      %v1556 = vmul.f32 %v1547, %v1553
      %v1557 = vmul.f32 %v1543, %v1553
      %v1558 = vmul.f32 %v1548, %v1553
      %v1559 = vmul.f32 %v1544, %v1553
      %v1560 = vmul.f32 %v1549, %v1553
      %v1561 = vmul.f32 %v1545, %v1553
      %v1562 = vadd.f32 %v1503, %v1554
      %v1563 = vadd.f32 %v1504, %v1555
      %v1564 = vadd.f32 %v1505, %v1556
      %v1565 = vadd.f32 %v1506, %v1557
      %v1566 = vadd.f32 %v1507, %v1558
      %v1567 = vadd.f32 %v1508, %v1559
      %v1568 = vadd.f32 %v1509, %v1560
      %v1569 = vadd.f32 %v1510, %v1561
      %v1570 = vrot.slane %v1514, 7
      %v1571 = vrot.slane %v1518, 7
      %v1572 = vrot.slane %v1522, 7
      %v1573 = vrot.slane %v1526, 7
      %v1574 = vrot.slane %v1515, 7
      %v1575 = vrot.slane %v1519, 7
      %v1576 = vrot.slane %v1523, 7
      %v1577 = vrot.slane %v1527, 7
      %v1578 = vrot.slane %v1516, 7
      %v1579 = vrot.slane %v1520, 7
      %v1580 = vrot.slane %v1524, 7
      %v1581 = vrot.slane %v1528, 7
      %v1582 = vsel %vm982, %v1574, %v1578
      %v1583 = vsel %vm982, %v1575, %v1579
      %v1584 = vsel %vm982, %v1576, %v1580
      %v1585 = vsel %vm982, %v1577, %v1581
      %v1586 = vsel %vm982, %v1570, %v1574
      %v1587 = vsel %vm982, %v1571, %v1575
      %v1588 = vsel %vm982, %v1572, %v1576
      %v1589 = vsel %vm982, %v1573, %v1577
      %v1590 = vlaneseq
      %v1591 = vshrl.u32 %v1590, 7
      %v1592 = vsub.s32 0, %v1591
      %v1593 = vrot.slane %v907, %v1592
      %v1594 = vmul.f32 %v1586, %v1593
      %v1595 = vmul.f32 %v1582, %v1593
      %v1596 = vmul.f32 %v1587, %v1593
      %v1597 = vmul.f32 %v1583, %v1593
      %v1598 = vmul.f32 %v1588, %v1593
      %v1599 = vmul.f32 %v1584, %v1593
      %v1600 = vmul.f32 %v1589, %v1593
      %v1601 = vmul.f32 %v1585, %v1593
      %v1602 = vadd.f32 %v1562, %v1594
      %v1603 = vadd.f32 %v1563, %v1595
      %v1604 = vadd.f32 %v1564, %v1596
      %v1605 = vadd.f32 %v1565, %v1597
      %v1606 = vadd.f32 %v1566, %v1598
      %v1607 = vadd.f32 %v1567, %v1599
      %v1608 = vadd.f32 %v1568, %v1600
      %v1609 = vadd.f32 %v1569, %v1601
      %v1610 = vlaneseq
      %v1611 = vshrl.u32 %v1610, 7
      %v1612 = vsub.s32 1, %v1611
      %v1613 = vrot.slane %v907, %v1612
      %v1614 = vmul.f32 %v1515, %v1613
      %v1615 = vmul.f32 %v1516, %v1613
      %v1616 = vmul.f32 %v1519, %v1613
      %v1617 = vmul.f32 %v1520, %v1613
      %v1618 = vmul.f32 %v1523, %v1613
      %v1619 = vmul.f32 %v1524, %v1613
      %v1620 = vmul.f32 %v1527, %v1613
      %v1621 = vmul.f32 %v1528, %v1613
      %v1622 = vadd.f32 %v1602, %v1614
      %v1623 = vadd.f32 %v1603, %v1615
      %v1624 = vadd.f32 %v1604, %v1616
      %v1625 = vadd.f32 %v1605, %v1617
      %v1626 = vadd.f32 %v1606, %v1618
      %v1627 = vadd.f32 %v1607, %v1619
      %v1628 = vadd.f32 %v1608, %v1620
      %v1629 = vadd.f32 %v1609, %v1621
      %v1630 = vrot.slane %v1515, 1
      %v1631 = vrot.slane %v1519, 1
      %v1632 = vrot.slane %v1523, 1
      %v1633 = vrot.slane %v1527, 1
      %v1634 = vrot.slane %v1516, 1
      %v1635 = vrot.slane %v1520, 1
      %v1636 = vrot.slane %v1524, 1
      %v1637 = vrot.slane %v1528, 1
      %v1638 = vrot.slane %v1517, 1
      %v1639 = vrot.slane %v1521, 1
      %v1640 = vrot.slane %v1525, 1
      %v1641 = vrot.slane %v1529, 1
      %v1642 = vsel %vm1043, %v1634, %v1638
      %v1643 = vsel %vm1043, %v1635, %v1639
      %v1644 = vsel %vm1043, %v1636, %v1640
      %v1645 = vsel %vm1043, %v1637, %v1641
      %v1646 = vsel %vm1043, %v1630, %v1634
      %v1647 = vsel %vm1043, %v1631, %v1635
      %v1648 = vsel %vm1043, %v1632, %v1636
      %v1649 = vsel %vm1043, %v1633, %v1637
      %v1650 = vlaneseq
      %v1651 = vshrl.u32 %v1650, 7
      %v1652 = vsub.s32 2, %v1651
      %v1653 = vrot.slane %v907, %v1652
      %v1654 = vmul.f32 %v1646, %v1653
      %v1655 = vmul.f32 %v1642, %v1653
      %v1656 = vmul.f32 %v1647, %v1653
      %v1657 = vmul.f32 %v1643, %v1653
      %v1658 = vmul.f32 %v1648, %v1653
      %v1659 = vmul.f32 %v1644, %v1653
      %v1660 = vmul.f32 %v1649, %v1653
      %v1661 = vmul.f32 %v1645, %v1653
      %v1662 = vadd.f32 %v1622, %v1654
      %v1663 = vadd.f32 %v1623, %v1655
      %v1664 = vadd.f32 %v1624, %v1656
      %v1665 = vadd.f32 %v1625, %v1657
      %v1666 = vadd.f32 %v1626, %v1658
      %v1667 = vadd.f32 %v1627, %v1659
      %v1668 = vadd.f32 %v1628, %v1660
      %v1669 = vadd.f32 %v1629, %v1661
      %v1670 = vrot.slane %v1515, 2
      %v1671 = vrot.slane %v1519, 2
      %v1672 = vrot.slane %v1523, 2
      %v1673 = vrot.slane %v1527, 2
      %v1674 = vrot.slane %v1516, 2
      %v1675 = vrot.slane %v1520, 2
      %v1676 = vrot.slane %v1524, 2
      %v1677 = vrot.slane %v1528, 2
      %v1678 = vrot.slane %v1517, 2
      %v1679 = vrot.slane %v1521, 2
      %v1680 = vrot.slane %v1525, 2
      %v1681 = vrot.slane %v1529, 2
      %v1682 = vsel %vm1084, %v1674, %v1678
      %v1683 = vsel %vm1084, %v1675, %v1679
      %v1684 = vsel %vm1084, %v1676, %v1680
      %v1685 = vsel %vm1084, %v1677, %v1681
      %v1686 = vsel %vm1084, %v1670, %v1674
      %v1687 = vsel %vm1084, %v1671, %v1675
      %v1688 = vsel %vm1084, %v1672, %v1676
      %v1689 = vsel %vm1084, %v1673, %v1677
      %v1690 = vlaneseq
      %v1691 = vshrl.u32 %v1690, 7
      %v1692 = vsub.s32 3, %v1691
      %v1693 = vrot.slane %v907, %v1692
      %v1694 = vmul.f32 %v1686, %v1693
      %v1695 = vmul.f32 %v1682, %v1693
      %v1696 = vmul.f32 %v1687, %v1693
      %v1697 = vmul.f32 %v1683, %v1693
      %v1698 = vmul.f32 %v1688, %v1693
      %v1699 = vmul.f32 %v1684, %v1693
      %v1700 = vmul.f32 %v1689, %v1693
      %v1701 = vmul.f32 %v1685, %v1693
      %v1702 = vadd.f32 %v1662, %v1694
      %v1703 = vadd.f32 %v1663, %v1695
      %v1704 = vadd.f32 %v1664, %v1696
      %v1705 = vadd.f32 %v1665, %v1697
      %v1706 = vadd.f32 %v1666, %v1698
      %v1707 = vadd.f32 %v1667, %v1699
      %v1708 = vadd.f32 %v1668, %v1700
      %v1709 = vadd.f32 %v1669, %v1701
      %s1710 = sadd.s32 %s904, 4
      %s1711 = smul.u32 %s1710, 32
      %s1712 = scalar_lea.vmem [#allocation2], %s1711
      %v1713 = vld [vmem:[%s1712] sm:$0xff]
      %v1714 = vld [vmem:[%s1712 + $0x8] sm:$0xff]
      %v1715 = vld [vmem:[%s1712 + $0x10] sm:$0xff]
      %v1716 = vld [vmem:[%s1712 + $0x18] sm:$0xff]
      %v1717 = vld [vmem:[%s1712 + $0x20] sm:$0xff]
      %v1718 = vld [vmem:[%s1712 + $0x28] sm:$0xff]
      %v1719 = vld [vmem:[%s1712 + $0x30] sm:$0xff]
      %v1720 = vld [vmem:[%s1712 + $0x38] sm:$0xff]
      %v1721 = vld [vmem:[%s1712 + $0x40] sm:$0xff]
      %v1722 = vld [vmem:[%s1712 + $0x48] sm:$0xff]
      %v1723 = vld [vmem:[%s1712 + $0x50] sm:$0xff]
      %v1724 = vld [vmem:[%s1712 + $0x58] sm:$0xff]
      %v1725 = vld [vmem:[%s1712 + $0x60] sm:$0xff]
      %v1726 = vld [vmem:[%s1712 + $0x68] sm:$0xff]
      %v1727 = vld [vmem:[%s1712 + $0x70] sm:$0xff]
      %v1728 = vld [vmem:[%s1712 + $0x78] sm:$0xff]
      %v1729 = vrot.slane %v1713, 6
      %v1730 = vrot.slane %v1717, 6
      %v1731 = vrot.slane %v1721, 6
      %v1732 = vrot.slane %v1725, 6
      %v1733 = vrot.slane %v1714, 6
      %v1734 = vrot.slane %v1718, 6
      %v1735 = vrot.slane %v1722, 6
      %v1736 = vrot.slane %v1726, 6
      %v1737 = vrot.slane %v1715, 6
      %v1738 = vrot.slane %v1719, 6
      %v1739 = vrot.slane %v1723, 6
      %v1740 = vrot.slane %v1727, 6
      %v1741 = vsel %vm941, %v1733, %v1737
      %v1742 = vsel %vm941, %v1734, %v1738
      %v1743 = vsel %vm941, %v1735, %v1739
      %v1744 = vsel %vm941, %v1736, %v1740
      %v1745 = vsel %vm941, %v1729, %v1733
      %v1746 = vsel %vm941, %v1730, %v1734
      %v1747 = vsel %vm941, %v1731, %v1735
      %v1748 = vsel %vm941, %v1732, %v1736
      %v1749 = vlaneseq
      %v1750 = vshrl.u32 %v1749, 7
      %v1751 = vsub.s32 4, %v1750
      %v1752 = vrot.slane %v907, %v1751
      %v1753 = vmul.f32 %v1745, %v1752
      %v1754 = vmul.f32 %v1741, %v1752
      %v1755 = vmul.f32 %v1746, %v1752
      %v1756 = vmul.f32 %v1742, %v1752
      %v1757 = vmul.f32 %v1747, %v1752
      %v1758 = vmul.f32 %v1743, %v1752
      %v1759 = vmul.f32 %v1748, %v1752
      %v1760 = vmul.f32 %v1744, %v1752
      %v1761 = vadd.f32 %v1702, %v1753
      %v1762 = vadd.f32 %v1703, %v1754
      %v1763 = vadd.f32 %v1704, %v1755
      %v1764 = vadd.f32 %v1705, %v1756
      %v1765 = vadd.f32 %v1706, %v1757
      %v1766 = vadd.f32 %v1707, %v1758
      %v1767 = vadd.f32 %v1708, %v1759
      %v1768 = vadd.f32 %v1709, %v1760
      %v1769 = vrot.slane %v1713, 7
      %v1770 = vrot.slane %v1717, 7
      %v1771 = vrot.slane %v1721, 7
      %v1772 = vrot.slane %v1725, 7
      %v1773 = vrot.slane %v1714, 7
      %v1774 = vrot.slane %v1718, 7
      %v1775 = vrot.slane %v1722, 7
      %v1776 = vrot.slane %v1726, 7
      %v1777 = vrot.slane %v1715, 7
      %v1778 = vrot.slane %v1719, 7
      %v1779 = vrot.slane %v1723, 7
      %v1780 = vrot.slane %v1727, 7
      %v1781 = vsel %vm982, %v1773, %v1777
      %v1782 = vsel %vm982, %v1774, %v1778
      %v1783 = vsel %vm982, %v1775, %v1779
      %v1784 = vsel %vm982, %v1776, %v1780
      %v1785 = vsel %vm982, %v1769, %v1773
      %v1786 = vsel %vm982, %v1770, %v1774
      %v1787 = vsel %vm982, %v1771, %v1775
      %v1788 = vsel %vm982, %v1772, %v1776
      %v1789 = vlaneseq
      %v1790 = vshrl.u32 %v1789, 7
      %v1791 = vsub.s32 5, %v1790
      %v1792 = vrot.slane %v907, %v1791
      %v1793 = vmul.f32 %v1785, %v1792
      %v1794 = vmul.f32 %v1781, %v1792
      %v1795 = vmul.f32 %v1786, %v1792
      %v1796 = vmul.f32 %v1782, %v1792
      %v1797 = vmul.f32 %v1787, %v1792
      %v1798 = vmul.f32 %v1783, %v1792
      %v1799 = vmul.f32 %v1788, %v1792
      %v1800 = vmul.f32 %v1784, %v1792
      %v1801 = vadd.f32 %v1761, %v1793
      %v1802 = vadd.f32 %v1762, %v1794
      %v1803 = vadd.f32 %v1763, %v1795
      %v1804 = vadd.f32 %v1764, %v1796
      %v1805 = vadd.f32 %v1765, %v1797
      %v1806 = vadd.f32 %v1766, %v1798
      %v1807 = vadd.f32 %v1767, %v1799
      %v1808 = vadd.f32 %v1768, %v1800
      %v1809 = vlaneseq
      %v1810 = vshrl.u32 %v1809, 7
      %v1811 = vsub.s32 6, %v1810
      %v1812 = vrot.slane %v907, %v1811
      %v1813 = vmul.f32 %v1714, %v1812
      %v1814 = vmul.f32 %v1715, %v1812
      %v1815 = vmul.f32 %v1718, %v1812
      %v1816 = vmul.f32 %v1719, %v1812
      %v1817 = vmul.f32 %v1722, %v1812
      %v1818 = vmul.f32 %v1723, %v1812
      %v1819 = vmul.f32 %v1726, %v1812
      %v1820 = vmul.f32 %v1727, %v1812
      %v1821 = vadd.f32 %v1801, %v1813
      %v1822 = vadd.f32 %v1802, %v1814
      %v1823 = vadd.f32 %v1803, %v1815
      %v1824 = vadd.f32 %v1804, %v1816
      %v1825 = vadd.f32 %v1805, %v1817
      %v1826 = vadd.f32 %v1806, %v1818
      %v1827 = vadd.f32 %v1807, %v1819
      %v1828 = vadd.f32 %v1808, %v1820
      %v1829 = vrot.slane %v1714, 1
      %v1830 = vrot.slane %v1718, 1
      %v1831 = vrot.slane %v1722, 1
      %v1832 = vrot.slane %v1726, 1
      %v1833 = vrot.slane %v1715, 1
      %v1834 = vrot.slane %v1719, 1
      %v1835 = vrot.slane %v1723, 1
      %v1836 = vrot.slane %v1727, 1
      %v1837 = vrot.slane %v1716, 1
      %v1838 = vrot.slane %v1720, 1
      %v1839 = vrot.slane %v1724, 1
      %v1840 = vrot.slane %v1728, 1
      %v1841 = vsel %vm1043, %v1833, %v1837
      %v1842 = vsel %vm1043, %v1834, %v1838
      %v1843 = vsel %vm1043, %v1835, %v1839
      %v1844 = vsel %vm1043, %v1836, %v1840
      %v1845 = vsel %vm1043, %v1829, %v1833
      %v1846 = vsel %vm1043, %v1830, %v1834
      %v1847 = vsel %vm1043, %v1831, %v1835
      %v1848 = vsel %vm1043, %v1832, %v1836
      %v1849 = vlaneseq
      %v1850 = vshrl.u32 %v1849, 7
      %v1851 = vsub.s32 7, %v1850
      %v1852 = vrot.slane %v907, %v1851
      %v1853 = vmul.f32 %v1845, %v1852
      %v1854 = vmul.f32 %v1841, %v1852
      %v1855 = vmul.f32 %v1846, %v1852
      %v1856 = vmul.f32 %v1842, %v1852
      %v1857 = vmul.f32 %v1847, %v1852
      %v1858 = vmul.f32 %v1843, %v1852
      %v1859 = vmul.f32 %v1848, %v1852
      %v1860 = vmul.f32 %v1844, %v1852
      %v1861 = vadd.f32 %v1821, %v1853
      %v1862 = vadd.f32 %v1822, %v1854
      %v1863 = vadd.f32 %v1823, %v1855
      %v1864 = vadd.f32 %v1824, %v1856
      %v1865 = vadd.f32 %v1825, %v1857
      %v1866 = vadd.f32 %v1826, %v1858
      %v1867 = vadd.f32 %v1827, %v1859
      %v1868 = vadd.f32 %v1828, %v1860
      %v1869 = vrot.slane %v1714, 2
      %v1870 = vrot.slane %v1718, 2
      %v1871 = vrot.slane %v1722, 2
      %v1872 = vrot.slane %v1726, 2
      %v1873 = vrot.slane %v1715, 2
      %v1874 = vrot.slane %v1719, 2
      %v1875 = vrot.slane %v1723, 2
      %v1876 = vrot.slane %v1727, 2
      %v1877 = vrot.slane %v1716, 2
      %v1878 = vrot.slane %v1720, 2
      %v1879 = vrot.slane %v1724, 2
      %v1880 = vrot.slane %v1728, 2
      %v1881 = vsel %vm1084, %v1873, %v1877
      %v1882 = vsel %vm1084, %v1874, %v1878
      %v1883 = vsel %vm1084, %v1875, %v1879
      %v1884 = vsel %vm1084, %v1876, %v1880
      %v1885 = vsel %vm1084, %v1869, %v1873
      %v1886 = vsel %vm1084, %v1870, %v1874
      %v1887 = vsel %vm1084, %v1871, %v1875
      %v1888 = vsel %vm1084, %v1872, %v1876
      %v1889 = vlaneseq
      %v1890 = vshrl.u32 %v1889, 7
      %v1891 = vsub.s32 0, %v1890
      %v1892 = vrot.slane %v908, %v1891
      %v1893 = vmul.f32 %v1885, %v1892
      %v1894 = vmul.f32 %v1881, %v1892
      %v1895 = vmul.f32 %v1886, %v1892
      %v1896 = vmul.f32 %v1882, %v1892
      %v1897 = vmul.f32 %v1887, %v1892
      %v1898 = vmul.f32 %v1883, %v1892
      %v1899 = vmul.f32 %v1888, %v1892
      %v1900 = vmul.f32 %v1884, %v1892
      %v1901 = vadd.f32 %v1861, %v1893
      %v1902 = vadd.f32 %v1862, %v1894
      %v1903 = vadd.f32 %v1863, %v1895
      %v1904 = vadd.f32 %v1864, %v1896
      %v1905 = vadd.f32 %v1865, %v1897
      %v1906 = vadd.f32 %v1866, %v1898
      %v1907 = vadd.f32 %v1867, %v1899
      %v1908 = vadd.f32 %v1868, %v1900
      %v1909 = vld [vmem:[%s5] sm:$0x1]
      %v1911 = vlaneseq
      %v1912 = vshrl.u32 %v1911, 7
      %v1913 = vsub.s32 0, %v1912
      %v1914 = vrot.slane %v1909, %v1913
      %v1916 = vmul.f32 %v1901, %v1914
      %v1917 = vmul.f32 %v1902, %v1914
      %v1918 = vmul.f32 %v1903, %v1914
      %v1919 = vmul.f32 %v1904, %v1914
      %v1920 = vmul.f32 %v1905, %v1914
      %v1921 = vmul.f32 %v1906, %v1914
      %v1922 = vmul.f32 %v1907, %v1914
      %v1923 = vmul.f32 %v1908, %v1914
      %v1924 = vld [vmem:[%s6] sm:$0x1]
      %v1926 = vlaneseq
      %v1927 = vshrl.u32 %v1926, 7
      %v1928 = vsub.s32 0, %v1927
      %v1929 = vrot.slane %v1924, %v1928
      %v1931 = vadd.f32 %v1916, %v1929
      %v1932 = vadd.f32 %v1917, %v1929
      %v1933 = vadd.f32 %v1918, %v1929
      %v1934 = vadd.f32 %v1919, %v1929
      %v1935 = vadd.f32 %v1920, %v1929
      %v1936 = vadd.f32 %v1921, %v1929
      %v1937 = vadd.f32 %v1922, %v1929
      %v1938 = vadd.f32 %v1923, %v1929
      %v1939 = vmax.f32 %v1931, 0.0
      %v1940 = vmax.f32 %v1932, 0.0
      %v1941 = vmax.f32 %v1933, 0.0
      %v1942 = vmax.f32 %v1934, 0.0
      %v1943 = vmax.f32 %v1935, 0.0
      %v1944 = vmax.f32 %v1936, 0.0
      %v1945 = vmax.f32 %v1937, 0.0
      %v1946 = vmax.f32 %v1938, 0.0
      %v1947 = vpack.c.bf16 %v1940, %v1939
      %v1948 = vpack.c.bf16 %v1942, %v1941
      %v1949 = vpack.c.bf16 %v1944, %v1943
      %v1950 = vpack.c.bf16 %v1946, %v1945
      %v1955 = vunpack.c.l.b16 %v1947
      %v1956 = vunpack.c.h.b16 %v1947
      %v1957 = vunpack.c.l.b16 %v1948
      %v1958 = vunpack.c.h.b16 %v1948
      %v1959 = vunpack.c.l.b16 %v1949
      %v1960 = vunpack.c.h.b16 %v1949
      %v1961 = vunpack.c.l.b16 %v1950
      %v1962 = vunpack.c.h.b16 %v1950
      %v1963 = vpack.c.b16 %v1955, %v1955
      %v1964 = vpack.c.b16 %v1956, %v1956
      %v1965 = vpack.c.b16 %v1957, %v1957
      %v1966 = vpack.c.b16 %v1958, %v1958
      %v1967 = vpack.c.b16 %v1959, %v1959
      %v1968 = vpack.c.b16 %v1960, %v1960
      %v1969 = vpack.c.b16 %v1961, %v1961
      %v1970 = vpack.c.b16 %v1962, %v1962
      %1979 = vst [vmem:[%s302] sm:$0xf] %v1963
      %1980 = vst [vmem:[%s302 + $0x4] sm:$0xf] %v1964
      %1981 = vst [vmem:[%s302 + $0x8] sm:$0xf] %v1965
      %1982 = vst [vmem:[%s302 + $0xc] sm:$0xf] %v1966
      %1983 = vst [vmem:[%s302 + $0x10] sm:$0xf] %v1967
      %1984 = vst [vmem:[%s302 + $0x14] sm:$0xf] %v1968
      %1985 = vst [vmem:[%s302 + $0x18] sm:$0xf] %v1969
      %1986 = vst [vmem:[%s302 + $0x1c] sm:$0xf] %v1970
      %s1987 = smul.u32 4, %s23
      %p1988 = scmp.lt.s32.totalorder %s22, 1
      %s1989 = scalar_select %p1988, %s22, 1
      %p1990 = scmp.lt.s32.totalorder %s1987, 15
      %s1991 = scalar_select %p1990, %s1987, 15
      %s1992 = smul.addr %s1991, 2
      %s1993 = smul.addr %s1989, 32
      %s1994 = sadd.s32 %s1992, %s1993
      %s1995 = smul.addr %s1994, 4
      %s1996 = scalar_lea.vmem %s7, %s1995
      // Predicated region
      $region53: #{light_conv_bn_act.1} parent=47 // pred_check
        %p1997 = pneg %p202
      $region54: #{light_conv_bn_act.1} parent=47 // pred_check_branch
        %1999 = sbr.rel (%p1997) target = $region56
      $region55: #{light_conv_bn_act.1} parent=47 // pred_region
        %s2000 = smul.u32 4, %s23
      $region56: #{light_conv_bn_act.1} parent=47 // pred_fallthru
        _
    $region48: #{light_conv_bn_act.1} parent=5 // pred_fallthru
      _
    %p2001 = scmp.le.s32.totalorder 2, %s13
    // Predicated region
    $region57: #{light_conv_bn_act.1} parent=5 // pred_check
      %p2002 = pneg %p2001
    $region58: #{light_conv_bn_act.1} parent=5 // pred_check_branch
      %2004 = sbr.rel (%p2002) target = $region60
    $region59: #{light_conv_bn_act.1} parent=5 // pred_region
      %s2005 = ssub.s32 %s13, 2
      // Predicated region
      $region61: #{light_conv_bn_act.1} parent=59 // pred_check
        %p2006 = pneg %p208
      $region62: #{light_conv_bn_act.1} parent=59 // pred_check_branch
        %2008 = sbr.rel (%p2006) target = $region64
      $region63: #{light_conv_bn_act.1} parent=59 // pred_region
        %s2009 = smul.u32 4, %s25
        %p2010 = scmp.lt.s32.totalorder %s24, 1
        %s2011 = scalar_select %p2010, %s24, 1
        %p2012 = scmp.lt.s32.totalorder %s2009, 15
        %s2013 = scalar_select %p2012, %s2009, 15
        %s2014 = smul.addr %s2013, 2
        %s2015 = smul.addr %s2011, 32
        %s2016 = sadd.s32 %s2014, %s2015
        %s2017 = smul.addr %s2016, 4
        %s2018 = scalar_lea.vmem %s7, %s2017
      $region64: #{light_conv_bn_act.1} parent=59 // pred_fallthru
        _
    $region60: #{light_conv_bn_act.1} parent=5 // pred_fallthru
      _
  $region6: #{light_conv_bn_act.1} parent=0 // loop_footer
    %s17 = sadd.s32 1, %s13
  $region7: #{light_conv_bn_act.1} parent=0 // loop_footer_branch
    %12 = sbr.rel target = $region3
  $region8: #{light_conv_bn_act.1} parent=0 // loop_exit
    _

</llo_original>
